<compile_context>
chip_gen: v7x
topology: tpu7x:2x2x1
jax: 0.10.0
libtpu: 0.0.40
codegen_flags: <defaults>
</compile_context>

<pallas_src>
import functools
import math

import jax
import jax.numpy as jnp
from jax.experimental import pallas as pl
from jax.experimental.pallas import tpu as pltpu


# ----------------------------------------------------------------------------
# Pallas kernel: the FULL encoder stack (all layers), one invocation, no grid.
# ----------------------------------------------------------------------------
def _encoder_stack_kernel(
    x_ref,       # (N, D)            f32   embeddings + positional encoding, N = B*S
    bias_ref,    # (N, N)            f32   additive attention mask (0 / -1e9)
    w_in_ref,    # (L, D, Dff+3D)    bf16  [ W1 | Wq*scale | Wk | Wv ]  (lane concat)
    w_out_ref,   # (L, D+Dff, D)     bf16  [ Wo ; W2 ]                  (sublane concat)
    vecs_ref,    # (L, 4, C)         f32   packed biases / LayerNorm params
    o_ref,       # (N, D)            f32
    *, num_layers: int, heads: int, d_ff: int,
):
    N, D = x_ref.shape
    H = heads
    hd = D // H
    f32 = jnp.float32
    bf16 = jnp.bfloat16

    def layernorm(y, g, b):
        mu = jnp.mean(y, axis=-1, keepdims=True)
        var = jnp.mean(jnp.square(y - mu), axis=-1, keepdims=True)
        return (y - mu) * jax.lax.rsqrt(var + 1e-5) * g + b

    bias = bias_ref[...]                                   # (N, N) f32, shared by all layers/heads
    x = x_ref[...]                                         # (N, D) f32

    for l in range(num_layers):     # static unroll; all weights VMEM resident
        w_in_l = w_in_ref[l]                               # (D, Dff+3D) bf16
        w_out_l = w_out_ref[l]                             # (D+Dff, D)  bf16
        v_l = vecs_ref[l]                                  # (4, C)      f32

        w1 = w_in_l[:, :d_ff]                              # (D, Dff)
        wqkv = w_in_l[:, d_ff:]                            # (D, 3D)   Q-cols pre-scaled
        wo = w_out_l[:D]                                   # (D, D)
        w2 = w_out_l[D:]                                   # (Dff, D)

        bqkv = v_l[0:1, :3 * D]                            # (1, 3D)   Q-part pre-scaled
        b1 = v_l[1:2, :d_ff]                               # (1, Dff)
        bo = v_l[2:3, 0:D]
        ln1_g = v_l[2:3, D:2 * D]
        ln1_b = v_l[2:3, 2 * D:3 * D]
        b2 = v_l[2:3, 3 * D:4 * D]
        ln2_g = v_l[3:4, 0:D]
        ln2_b = v_l[3:4, D:2 * D]

        # ---- fused Q/K/V projection: one lane-dense matmul ----------------------
        xb = x.astype(bf16)
        qkv = jnp.dot(xb, wqkv, preferred_element_type=f32) + bqkv     # (N, 3D) f32
        qkv_b = qkv.astype(bf16)

        # K transposed once per layer so score matmuls contract a sublane-major RHS.
        kt = qkv[:, D:2 * D].T                             # (D, N) f32

        # ---- attention over the full row axis, per-head lane slices -------------
        ctx_cols = []
        for h in range(H):                                 # static loop == MXU push structure
            q_h = qkv_b[:, h * hd:(h + 1) * hd]            # (N, hd) bf16
            kt_h = kt[h * hd:(h + 1) * hd].astype(bf16)    # (hd, N) bf16
            v_h = qkv_b[:, 2 * D + h * hd:2 * D + (h + 1) * hd]  # (N, hd) bf16

            s = jnp.dot(q_h, kt_h, preferred_element_type=f32)   # (N, N) f32 (scale folded)
            s = s + bias                                          # batch sep + key padding
            s = s - jnp.max(s, axis=-1, keepdims=True)
            p = jnp.exp(s)
            p = p * pl.reciprocal(jnp.sum(p, axis=-1, keepdims=True), approx=True)
            ctx_cols.append(jnp.dot(p.astype(bf16), v_h,
                                    preferred_element_type=f32))  # (N, hd) f32

        # heads adjacent in lanes -> single (N, D) @ (D, D) output projection
        ctx = jnp.concatenate(ctx_cols, axis=1)                   # (N, D) f32
        attn = jnp.dot(ctx.astype(bf16), wo, preferred_element_type=f32) + bo

        # ---- Add & Norm 1 --------------------------------------------------------
        a = layernorm(x + attn, ln1_g, ln1_b)

        # ---- FeedForward (Linear -> ReLU -> Linear), batch folded ----------------
        h1 = jnp.dot(a.astype(bf16), w1, preferred_element_type=f32) + b1
        h1 = jnp.maximum(h1, 0.0)
        ff = jnp.dot(h1.astype(bf16), w2, preferred_element_type=f32) + b2

        # ---- Add & Norm 2 --------------------------------------------------------
        x = layernorm(a + ff, ln2_g, ln2_b)

    o_ref[...] = x.astype(o_ref.dtype)


# ----------------------------------------------------------------------------
# Wrapper: pack per-layer weights into a few lane-dense slabs and call the kernel.
# ----------------------------------------------------------------------------
def pack_params(layer_params, heads):
    D = layer_params[0]["wq"].shape[0]
    d_ff = layer_params[0]["w1"].shape[1]
    hd = D // heads
    scale = 1.0 / math.sqrt(hd)
    C = max(4 * D, 3 * D, d_ff)

    w_in, w_out, vecs = [], [], []
    for p in layer_params:
        # softmax scale folded into Q projection (weight AND bias), wrapper-side.
        wqkv = jnp.concatenate([p["wq"] * scale, p["wk"], p["wv"]], axis=1)   # (D, 3D)
        w_in.append(jnp.concatenate([p["w1"], wqkv], axis=1))                 # (D, Dff+3D)
        w_out.append(jnp.concatenate([p["wo"], p["w2"]], axis=0))             # (D+Dff, D)

        bqkv = jnp.concatenate([p["bq"] * scale, p["bk"], p["bv"]], axis=1)[0]  # (3D,)
        v = jnp.zeros((4, C), jnp.float32)
        v = v.at[0, :3 * D].set(bqkv)
        v = v.at[1, :d_ff].set(p["b1"][0])
        v = v.at[2, 0:D].set(p["bo"][0])
        v = v.at[2, D:2 * D].set(p["ln1_g"][0])
        v = v.at[2, 2 * D:3 * D].set(p["ln1_b"][0])
        v = v.at[2, 3 * D:4 * D].set(p["b2"][0])
        v = v.at[3, 0:D].set(p["ln2_g"][0])
        v = v.at[3, D:2 * D].set(p["ln2_b"][0])
        vecs.append(v)

    return dict(
        w_in=jnp.stack(w_in).astype(jnp.bfloat16),     # (L, D, Dff+3D)
        w_out=jnp.stack(w_out).astype(jnp.bfloat16),   # (L, D+Dff, D)
        vecs=jnp.stack(vecs).astype(jnp.float32),      # (L, 4, C)
    )


def encoder_stack(x, mask, packed, *, heads):
    B, S, D = x.shape
    N = B * S
    L = packed["w_in"].shape[0]
    d_ff = packed["w_out"].shape[1] - D
    x_flat = x.reshape(N, D).astype(jnp.float32)       # batch folded into rows

    # (N, N) additive attention bias built ONCE: block-diagonal batch separation
    # plus key padding from `mask` (1 = attend, 0 = masked key).
    # NOTE: if a row is ever fully masked the softmax becomes uniform (not NaN).
    batch_ids = jnp.repeat(jnp.arange(B), S)
    same_batch = batch_ids[:, None] == batch_ids[None, :]
    key_valid = mask.reshape(N) != 0.0
    bias = jnp.where(same_batch & key_valid[None, :], 0.0, -1e9).astype(jnp.float32)

    kernel = functools.partial(_encoder_stack_kernel,
                               num_layers=L, heads=heads, d_ff=d_ff)
    vspec = pl.BlockSpec(memory_space=pltpu.MemorySpace.VMEM)
    out = pl.pallas_call(
        kernel,
        out_shape=jax.ShapeDtypeStruct((N, D), jnp.float32),
        in_specs=[vspec] * 5,
        out_specs=vspec,
    )(x_flat, bias, packed["w_in"], packed["w_out"], packed["vecs"])
    return out.reshape(B, S, D)


# ----------------------------------------------------------------------------
# Parameter init + plain-JAX glue (embedding gather, positional encoding table)
# ----------------------------------------------------------------------------
def make_positional_encoding(max_len, d_model):
    pos = jnp.arange(max_len, dtype=jnp.float32)[:, None]
    div = jnp.exp(jnp.arange(0, d_model, 2, dtype=jnp.float32)
                  * (-math.log(10000.0) / d_model))
    pe = jnp.zeros((max_len, d_model), dtype=jnp.float32)
    pe = pe.at[:, 0::2].set(jnp.sin(pos * div))
    pe = pe.at[:, 1::2].set(jnp.cos(pos * div))
    return pe


def init_params(key, vocab_size, d_model, num_layers, forward_expansion):
    d_ff = d_model * forward_expansion
    keys = jax.random.split(key, 1 + num_layers)
    emb = 0.02 * jax.random.normal(keys[0], (vocab_size, d_model), jnp.float32)

    layers = []
    for li in range(num_layers):
        ks = jax.random.split(keys[1 + li], 6)
        s = 0.02
        layers.append(dict(
            wq=s * jax.random.normal(ks[0], (d_model, d_model), jnp.float32),
            bq=jnp.zeros((1, d_model), jnp.float32),
            wk=s * jax.random.normal(ks[1], (d_model, d_model), jnp.float32),
            bk=jnp.zeros((1, d_model), jnp.float32),
            wv=s * jax.random.normal(ks[2], (d_model, d_model), jnp.float32),
            bv=jnp.zeros((1, d_model), jnp.float32),
            wo=s * jax.random.normal(ks[3], (d_model, d_model), jnp.float32),
            bo=jnp.zeros((1, d_model), jnp.float32),
            ln1_g=jnp.ones((1, d_model), jnp.float32),
            ln1_b=jnp.zeros((1, d_model), jnp.float32),
            w1=s * jax.random.normal(ks[4], (d_model, d_ff), jnp.float32),
            b1=jnp.zeros((1, d_ff), jnp.float32),
            w2=s * jax.random.normal(ks[5], (d_ff, d_model), jnp.float32),
            b2=jnp.zeros((1, d_model), jnp.float32),
            ln2_g=jnp.ones((1, d_model), jnp.float32),
            ln2_b=jnp.zeros((1, d_model), jnp.float32),
        ))
    return emb, layers


def encoder_forward(tokens, mask, emb, packed, pe, heads):
    # Embedding gather + positional-encoding add are plain-JAX glue.
    out = jnp.take(emb, tokens, axis=0)                  # (B, S, D)
    out = out + pe[None, : tokens.shape[1], :]
    # dropout=None -> no dropout (matches the module config).
    return encoder_stack(out, mask, packed, heads=heads)


# ----------------------------------------------------------------------------
if __name__ == "__main__":
    vocab_size = 50
    d_model = 32
    num_layers = 2
    heads = 4
    forward_expansion = 4
    max_len = 64
    B, S = 2, 8
    assert d_model % heads == 0

    key = jax.random.PRNGKey(0)
    k_tok, k_par = jax.random.split(key)

    tokens = jax.random.randint(k_tok, (B, S), 0, vocab_size, dtype=jnp.int32)
    mask = jnp.ones((B, 1, S), jnp.float32)
    mask = mask.at[1, 0, S - 2:].set(0.0)   # mask last two keys of second sequence

    emb, layer_params = init_params(k_par, vocab_size, d_model, num_layers,
                                    forward_expansion)
    pe = make_positional_encoding(max_len, d_model)
    packed = pack_params(layer_params, heads)

    out = encoder_forward(tokens, mask, emb, packed, pe, heads)
    out = jax.block_until_ready(out)
    assert out.shape == (B, S, d_model)
    assert bool(jnp.all(jnp.isfinite(out)))
    print("KERNEL_OK")
</pallas_src>

<mosaic_0001>
module attributes {stable_mosaic.version = 11 : i64} {
  func.func @_encoder_stack_kernel(%arg0: memref<16x32xf32, #tpu.memory_space<vmem>>, %arg1: memref<16x16xf32, #tpu.memory_space<vmem>>, %arg2: memref<2x32x224xbf16, #tpu.memory_space<vmem>>, %arg3: memref<2x160x32xbf16, #tpu.memory_space<vmem>>, %arg4: memref<2x4x128xf32, #tpu.memory_space<vmem>>, %arg5: memref<16x32xf32, #tpu.memory_space<vmem>>) attributes {dimension_semantics = [], scalar_prefetch = 0 : i64, scratch_operands = 0 : i64, tpu.core_type = #tpu.core_type<tc>} {
    %c0 = arith.constant 0 : index
    %c0_0 = arith.constant 0 : index
    %0 = vector.load %arg1[%c0, %c0_0] : memref<16x16xf32, #tpu.memory_space<vmem>>, vector<16x16xf32>
    %c0_1 = arith.constant 0 : index
    %c0_2 = arith.constant 0 : index
    %1 = vector.load %arg0[%c0_1, %c0_2] : memref<16x32xf32, #tpu.memory_space<vmem>>, vector<16x32xf32>
    %c0_3 = arith.constant 0 : index
    %c0_4 = arith.constant 0 : index
    %c0_5 = arith.constant 0 : index
    %2 = vector.load %arg2[%c0_3, %c0_4, %c0_5] : memref<2x32x224xbf16, #tpu.memory_space<vmem>>, vector<1x32x224xbf16>
    %3 = vector.shape_cast %2 : vector<1x32x224xbf16> to vector<32x224xbf16>
    %c0_6 = arith.constant 0 : index
    %c0_7 = arith.constant 0 : index
    %c0_8 = arith.constant 0 : index
    %4 = vector.load %arg3[%c0_6, %c0_7, %c0_8] : memref<2x160x32xbf16, #tpu.memory_space<vmem>>, vector<1x160x32xbf16>
    %5 = vector.shape_cast %4 : vector<1x160x32xbf16> to vector<160x32xbf16>
    %c0_9 = arith.constant 0 : index
    %c0_10 = arith.constant 0 : index
    %c0_11 = arith.constant 0 : index
    %6 = vector.load %arg4[%c0_9, %c0_10, %c0_11] : memref<2x4x128xf32, #tpu.memory_space<vmem>>, vector<1x4x128xf32>
    %7 = vector.shape_cast %6 : vector<1x4x128xf32> to vector<4x128xf32>
    %8 = vector.extract_strided_slice %3 {offsets = [0, 0], sizes = [32, 128], strides = [1, 1]} : vector<32x224xbf16> to vector<32x128xbf16>
    %9 = vector.extract_strided_slice %3 {offsets = [0, 128], sizes = [32, 96], strides = [1, 1]} : vector<32x224xbf16> to vector<32x96xbf16>
    %10 = vector.extract_strided_slice %5 {offsets = [0, 0], sizes = [32, 32], strides = [1, 1]} : vector<160x32xbf16> to vector<32x32xbf16>
    %11 = vector.extract_strided_slice %5 {offsets = [32, 0], sizes = [128, 32], strides = [1, 1]} : vector<160x32xbf16> to vector<128x32xbf16>
    %12 = vector.extract_strided_slice %7 {offsets = [0, 0], sizes = [1, 96], strides = [1, 1]} : vector<4x128xf32> to vector<1x96xf32>
    %13 = vector.extract_strided_slice %7 {offsets = [1, 0], sizes = [1, 128], strides = [1, 1]} : vector<4x128xf32> to vector<1x128xf32>
    %14 = vector.extract_strided_slice %7 {offsets = [2, 0], sizes = [1, 32], strides = [1, 1]} : vector<4x128xf32> to vector<1x32xf32>
    %15 = vector.extract_strided_slice %7 {offsets = [2, 32], sizes = [1, 32], strides = [1, 1]} : vector<4x128xf32> to vector<1x32xf32>
    %16 = vector.extract_strided_slice %7 {offsets = [2, 64], sizes = [1, 32], strides = [1, 1]} : vector<4x128xf32> to vector<1x32xf32>
    %17 = vector.extract_strided_slice %7 {offsets = [2, 96], sizes = [1, 32], strides = [1, 1]} : vector<4x128xf32> to vector<1x32xf32>
    %18 = vector.extract_strided_slice %7 {offsets = [3, 0], sizes = [1, 32], strides = [1, 1]} : vector<4x128xf32> to vector<1x32xf32>
    %19 = vector.extract_strided_slice %7 {offsets = [3, 32], sizes = [1, 32], strides = [1, 1]} : vector<4x128xf32> to vector<1x32xf32>
    %20 = arith.truncf %1 : vector<16x32xf32> to vector<16x32xbf16>
    %cst = arith.constant dense<0.000000e+00> : vector<16x96xf32>
    %21 = tpu.matmul %20, %9, %cst {dimension_numbers = #tpu.dot_dimension_numbers<[1], [0], [0], [1], [0, 0, 1, 1], [], []>} : vector<16x32xbf16>, vector<32x96xbf16>, vector<16x96xf32> -> vector<16x96xf32>
    %22 = vector.broadcast %12 : vector<1x96xf32> to vector<16x96xf32>
    %23 = arith.addf %21, %22 : vector<16x96xf32>
    %24 = arith.truncf %23 : vector<16x96xf32> to vector<16x96xbf16>
    %25 = vector.extract_strided_slice %23 {offsets = [0, 32], sizes = [16, 32], strides = [1, 1]} : vector<16x96xf32> to vector<16x32xf32>
    %26 = tpu.transpose %25, [1, 0] : vector<16x32xf32> -> vector<32x16xf32>
    %27 = vector.extract_strided_slice %24 {offsets = [0, 0], sizes = [16, 8], strides = [1, 1]} : vector<16x96xbf16> to vector<16x8xbf16>
    %28 = vector.extract_strided_slice %26 {offsets = [0, 0], sizes = [8, 16], strides = [1, 1]} : vector<32x16xf32> to vector<8x16xf32>
    %29 = arith.truncf %28 : vector<8x16xf32> to vector<8x16xbf16>
    %30 = vector.extract_strided_slice %24 {offsets = [0, 64], sizes = [16, 8], strides = [1, 1]} : vector<16x96xbf16> to vector<16x8xbf16>
    %cst_12 = arith.constant dense<0.000000e+00> : vector<16x16xf32>
    %31 = tpu.matmul %27, %29, %cst_12 {dimension_numbers = #tpu.dot_dimension_numbers<[1], [0], [0], [1], [0, 0, 1, 1], [], []>} : vector<16x8xbf16>, vector<8x16xbf16>, vector<16x16xf32> -> vector<16x16xf32>
    %32 = arith.addf %31, %0 : vector<16x16xf32>
    %cst_13 = arith.constant dense<0xFF800000> : vector<16xf32>
    %33 = vector.multi_reduction <maximumf>, %32, %cst_13 [1] : vector<16x16xf32> to vector<16xf32>
    %34 = vector.shape_cast %33 : vector<16xf32> to vector<16x1xf32>
    %35 = vector.broadcast %34 : vector<16x1xf32> to vector<16x16xf32>
    %36 = arith.subf %32, %35 : vector<16x16xf32>
    %37 = math.exp %36 : vector<16x16xf32>
    %cst_14 = arith.constant dense<0.000000e+00> : vector<16xf32>
    %38 = vector.multi_reduction <add>, %37, %cst_14 [1] : vector<16x16xf32> to vector<16xf32>
    %39 = vector.shape_cast %38 : vector<16xf32> to vector<16x1xf32>
    %40 = tpu.reciprocal %39 {approx = true} : vector<16x1xf32> -> vector<16x1xf32>
    %41 = vector.broadcast %40 : vector<16x1xf32> to vector<16x16xf32>
    %42 = arith.mulf %37, %41 : vector<16x16xf32>
    %43 = arith.truncf %42 : vector<16x16xf32> to vector<16x16xbf16>
    %cst_15 = arith.constant dense<0.000000e+00> : vector<16x8xf32>
    %44 = tpu.matmul %43, %30, %cst_15 {dimension_numbers = #tpu.dot_dimension_numbers<[1], [0], [0], [1], [0, 0, 1, 1], [], []>} : vector<16x16xbf16>, vector<16x8xbf16>, vector<16x8xf32> -> vector<16x8xf32>
    %45 = vector.extract_strided_slice %24 {offsets = [0, 8], sizes = [16, 8], strides = [1, 1]} : vector<16x96xbf16> to vector<16x8xbf16>
    %46 = vector.extract_strided_slice %26 {offsets = [8, 0], sizes = [8, 16], strides = [1, 1]} : vector<32x16xf32> to vector<8x16xf32>
    %47 = arith.truncf %46 : vector<8x16xf32> to vector<8x16xbf16>
    %48 = vector.extract_strided_slice %24 {offsets = [0, 72], sizes = [16, 8], strides = [1, 1]} : vector<16x96xbf16> to vector<16x8xbf16>
    %cst_16 = arith.constant dense<0.000000e+00> : vector<16x16xf32>
    %49 = tpu.matmul %45, %47, %cst_16 {dimension_numbers = #tpu.dot_dimension_numbers<[1], [0], [0], [1], [0, 0, 1, 1], [], []>} : vector<16x8xbf16>, vector<8x16xbf16>, vector<16x16xf32> -> vector<16x16xf32>
    %50 = arith.addf %49, %0 : vector<16x16xf32>
    %cst_17 = arith.constant dense<0xFF800000> : vector<16xf32>
    %51 = vector.multi_reduction <maximumf>, %50, %cst_17 [1] : vector<16x16xf32> to vector<16xf32>
    %52 = vector.shape_cast %51 : vector<16xf32> to vector<16x1xf32>
    %53 = vector.broadcast %52 : vector<16x1xf32> to vector<16x16xf32>
    %54 = arith.subf %50, %53 : vector<16x16xf32>
    %55 = math.exp %54 : vector<16x16xf32>
    %cst_18 = arith.constant dense<0.000000e+00> : vector<16xf32>
    %56 = vector.multi_reduction <add>, %55, %cst_18 [1] : vector<16x16xf32> to vector<16xf32>
    %57 = vector.shape_cast %56 : vector<16xf32> to vector<16x1xf32>
    %58 = tpu.reciprocal %57 {approx = true} : vector<16x1xf32> -> vector<16x1xf32>
    %59 = vector.broadcast %58 : vector<16x1xf32> to vector<16x16xf32>
    %60 = arith.mulf %55, %59 : vector<16x16xf32>
    %61 = arith.truncf %60 : vector<16x16xf32> to vector<16x16xbf16>
    %cst_19 = arith.constant dense<0.000000e+00> : vector<16x8xf32>
    %62 = tpu.matmul %61, %48, %cst_19 {dimension_numbers = #tpu.dot_dimension_numbers<[1], [0], [0], [1], [0, 0, 1, 1], [], []>} : vector<16x16xbf16>, vector<16x8xbf16>, vector<16x8xf32> -> vector<16x8xf32>
    %63 = vector.extract_strided_slice %24 {offsets = [0, 16], sizes = [16, 8], strides = [1, 1]} : vector<16x96xbf16> to vector<16x8xbf16>
    %64 = vector.extract_strided_slice %26 {offsets = [16, 0], sizes = [8, 16], strides = [1, 1]} : vector<32x16xf32> to vector<8x16xf32>
    %65 = arith.truncf %64 : vector<8x16xf32> to vector<8x16xbf16>
    %66 = vector.extract_strided_slice %24 {offsets = [0, 80], sizes = [16, 8], strides = [1, 1]} : vector<16x96xbf16> to vector<16x8xbf16>
    %cst_20 = arith.constant dense<0.000000e+00> : vector<16x16xf32>
    %67 = tpu.matmul %63, %65, %cst_20 {dimension_numbers = #tpu.dot_dimension_numbers<[1], [0], [0], [1], [0, 0, 1, 1], [], []>} : vector<16x8xbf16>, vector<8x16xbf16>, vector<16x16xf32> -> vector<16x16xf32>
    %68 = arith.addf %67, %0 : vector<16x16xf32>
    %cst_21 = arith.constant dense<0xFF800000> : vector<16xf32>
    %69 = vector.multi_reduction <maximumf>, %68, %cst_21 [1] : vector<16x16xf32> to vector<16xf32>
    %70 = vector.shape_cast %69 : vector<16xf32> to vector<16x1xf32>
    %71 = vector.broadcast %70 : vector<16x1xf32> to vector<16x16xf32>
    %72 = arith.subf %68, %71 : vector<16x16xf32>
    %73 = math.exp %72 : vector<16x16xf32>
    %cst_22 = arith.constant dense<0.000000e+00> : vector<16xf32>
    %74 = vector.multi_reduction <add>, %73, %cst_22 [1] : vector<16x16xf32> to vector<16xf32>
    %75 = vector.shape_cast %74 : vector<16xf32> to vector<16x1xf32>
    %76 = tpu.reciprocal %75 {approx = true} : vector<16x1xf32> -> vector<16x1xf32>
    %77 = vector.broadcast %76 : vector<16x1xf32> to vector<16x16xf32>
    %78 = arith.mulf %73, %77 : vector<16x16xf32>
    %79 = arith.truncf %78 : vector<16x16xf32> to vector<16x16xbf16>
    %cst_23 = arith.constant dense<0.000000e+00> : vector<16x8xf32>
    %80 = tpu.matmul %79, %66, %cst_23 {dimension_numbers = #tpu.dot_dimension_numbers<[1], [0], [0], [1], [0, 0, 1, 1], [], []>} : vector<16x16xbf16>, vector<16x8xbf16>, vector<16x8xf32> -> vector<16x8xf32>
    %81 = vector.extract_strided_slice %24 {offsets = [0, 24], sizes = [16, 8], strides = [1, 1]} : vector<16x96xbf16> to vector<16x8xbf16>
    %82 = vector.extract_strided_slice %26 {offsets = [24, 0], sizes = [8, 16], strides = [1, 1]} : vector<32x16xf32> to vector<8x16xf32>
    %83 = arith.truncf %82 : vector<8x16xf32> to vector<8x16xbf16>
    %84 = vector.extract_strided_slice %24 {offsets = [0, 88], sizes = [16, 8], strides = [1, 1]} : vector<16x96xbf16> to vector<16x8xbf16>
    %cst_24 = arith.constant dense<0.000000e+00> : vector<16x16xf32>
    %85 = tpu.matmul %81, %83, %cst_24 {dimension_numbers = #tpu.dot_dimension_numbers<[1], [0], [0], [1], [0, 0, 1, 1], [], []>} : vector<16x8xbf16>, vector<8x16xbf16>, vector<16x16xf32> -> vector<16x16xf32>
    %86 = arith.addf %85, %0 : vector<16x16xf32>
    %cst_25 = arith.constant dense<0xFF800000> : vector<16xf32>
    %87 = vector.multi_reduction <maximumf>, %86, %cst_25 [1] : vector<16x16xf32> to vector<16xf32>
    %88 = vector.shape_cast %87 : vector<16xf32> to vector<16x1xf32>
    %89 = vector.broadcast %88 : vector<16x1xf32> to vector<16x16xf32>
    %90 = arith.subf %86, %89 : vector<16x16xf32>
    %91 = math.exp %90 : vector<16x16xf32>
    %cst_26 = arith.constant dense<0.000000e+00> : vector<16xf32>
    %92 = vector.multi_reduction <add>, %91, %cst_26 [1] : vector<16x16xf32> to vector<16xf32>
    %93 = vector.shape_cast %92 : vector<16xf32> to vector<16x1xf32>
    %94 = tpu.reciprocal %93 {approx = true} : vector<16x1xf32> -> vector<16x1xf32>
    %95 = vector.broadcast %94 : vector<16x1xf32> to vector<16x16xf32>
    %96 = arith.mulf %91, %95 : vector<16x16xf32>
    %97 = arith.truncf %96 : vector<16x16xf32> to vector<16x16xbf16>
    %cst_27 = arith.constant dense<0.000000e+00> : vector<16x8xf32>
    %98 = tpu.matmul %97, %84, %cst_27 {dimension_numbers = #tpu.dot_dimension_numbers<[1], [0], [0], [1], [0, 0, 1, 1], [], []>} : vector<16x16xbf16>, vector<16x8xbf16>, vector<16x8xf32> -> vector<16x8xf32>
    %99 = tpu.concatenate %44, %62, %80, %98 in 1 : vector<16x8xf32>, vector<16x8xf32>, vector<16x8xf32>, vector<16x8xf32> -> vector<16x32xf32>
    %100 = arith.truncf %99 : vector<16x32xf32> to vector<16x32xbf16>
    %cst_28 = arith.constant dense<0.000000e+00> : vector<16x32xf32>
    %101 = tpu.matmul %100, %10, %cst_28 {dimension_numbers = #tpu.dot_dimension_numbers<[1], [0], [0], [1], [0, 0, 1, 1], [], []>} : vector<16x32xbf16>, vector<32x32xbf16>, vector<16x32xf32> -> vector<16x32xf32>
    %102 = vector.broadcast %14 : vector<1x32xf32> to vector<16x32xf32>
    %103 = arith.addf %101, %102 : vector<16x32xf32>
    %104 = arith.addf %1, %103 : vector<16x32xf32>
    %cst_29 = arith.constant dense<0.000000e+00> : vector<16xf32>
    %105 = vector.multi_reduction <add>, %104, %cst_29 [1] : vector<16x32xf32> to vector<16xf32>
    %106 = vector.shape_cast %105 : vector<16xf32> to vector<16x1xf32>
    %cst_30 = arith.constant 3.200000e+01 : f32
    %107 = vector.broadcast %cst_30 : f32 to vector<16x1xf32>
    %108 = arith.divf %106, %107 : vector<16x1xf32>
    %109 = vector.broadcast %108 : vector<16x1xf32> to vector<16x32xf32>
    %110 = arith.subf %104, %109 : vector<16x32xf32>
    %111 = arith.mulf %110, %110 : vector<16x32xf32>
    %cst_31 = arith.constant dense<0.000000e+00> : vector<16xf32>
    %112 = vector.multi_reduction <add>, %111, %cst_31 [1] : vector<16x32xf32> to vector<16xf32>
    %113 = vector.shape_cast %112 : vector<16xf32> to vector<16x1xf32>
    %cst_32 = arith.constant 3.200000e+01 : f32
    %114 = vector.broadcast %cst_32 : f32 to vector<16x1xf32>
    %115 = arith.divf %113, %114 : vector<16x1xf32>
    %116 = vector.broadcast %108 : vector<16x1xf32> to vector<16x32xf32>
    %117 = arith.subf %104, %116 : vector<16x32xf32>
    %cst_33 = arith.constant 9.99999974E-6 : f32
    %118 = vector.broadcast %cst_33 : f32 to vector<16x1xf32>
    %119 = arith.addf %115, %118 : vector<16x1xf32>
    %120 = math.rsqrt %119 : vector<16x1xf32>
    %121 = vector.broadcast %120 : vector<16x1xf32> to vector<16x32xf32>
    %122 = arith.mulf %117, %121 : vector<16x32xf32>
    %123 = vector.broadcast %15 : vector<1x32xf32> to vector<16x32xf32>
    %124 = arith.mulf %122, %123 : vector<16x32xf32>
    %125 = vector.broadcast %16 : vector<1x32xf32> to vector<16x32xf32>
    %126 = arith.addf %124, %125 : vector<16x32xf32>
    %127 = arith.truncf %126 : vector<16x32xf32> to vector<16x32xbf16>
    %cst_34 = arith.constant dense<0.000000e+00> : vector<16x128xf32>
    %128 = tpu.matmul %127, %8, %cst_34 {dimension_numbers = #tpu.dot_dimension_numbers<[1], [0], [0], [1], [0, 0, 1, 1], [], []>} : vector<16x32xbf16>, vector<32x128xbf16>, vector<16x128xf32> -> vector<16x128xf32>
    %129 = vector.broadcast %13 : vector<1x128xf32> to vector<16x128xf32>
    %130 = arith.addf %128, %129 : vector<16x128xf32>
    %cst_35 = arith.constant 0.000000e+00 : f32
    %131 = vector.broadcast %cst_35 : f32 to vector<16x128xf32>
    %132 = arith.maximumf %130, %131 : vector<16x128xf32>
    %133 = arith.truncf %132 : vector<16x128xf32> to vector<16x128xbf16>
    %cst_36 = arith.constant dense<0.000000e+00> : vector<16x32xf32>
    %134 = tpu.matmul %133, %11, %cst_36 {dimension_numbers = #tpu.dot_dimension_numbers<[1], [0], [0], [1], [0, 0, 1, 1], [], []>} : vector<16x128xbf16>, vector<128x32xbf16>, vector<16x32xf32> -> vector<16x32xf32>
    %135 = vector.broadcast %17 : vector<1x32xf32> to vector<16x32xf32>
    %136 = arith.addf %134, %135 : vector<16x32xf32>
    %137 = arith.addf %126, %136 : vector<16x32xf32>
    %cst_37 = arith.constant dense<0.000000e+00> : vector<16xf32>
    %138 = vector.multi_reduction <add>, %137, %cst_37 [1] : vector<16x32xf32> to vector<16xf32>
    %139 = vector.shape_cast %138 : vector<16xf32> to vector<16x1xf32>
    %cst_38 = arith.constant 3.200000e+01 : f32
    %140 = vector.broadcast %cst_38 : f32 to vector<16x1xf32>
    %141 = arith.divf %139, %140 : vector<16x1xf32>
    %142 = vector.broadcast %141 : vector<16x1xf32> to vector<16x32xf32>
    %143 = arith.subf %137, %142 : vector<16x32xf32>
    %144 = arith.mulf %143, %143 : vector<16x32xf32>
    %cst_39 = arith.constant dense<0.000000e+00> : vector<16xf32>
    %145 = vector.multi_reduction <add>, %144, %cst_39 [1] : vector<16x32xf32> to vector<16xf32>
    %146 = vector.shape_cast %145 : vector<16xf32> to vector<16x1xf32>
    %cst_40 = arith.constant 3.200000e+01 : f32
    %147 = vector.broadcast %cst_40 : f32 to vector<16x1xf32>
    %148 = arith.divf %146, %147 : vector<16x1xf32>
    %149 = vector.broadcast %141 : vector<16x1xf32> to vector<16x32xf32>
    %150 = arith.subf %137, %149 : vector<16x32xf32>
    %cst_41 = arith.constant 9.99999974E-6 : f32
    %151 = vector.broadcast %cst_41 : f32 to vector<16x1xf32>
    %152 = arith.addf %148, %151 : vector<16x1xf32>
    %153 = math.rsqrt %152 : vector<16x1xf32>
    %154 = vector.broadcast %153 : vector<16x1xf32> to vector<16x32xf32>
    %155 = arith.mulf %150, %154 : vector<16x32xf32>
    %156 = vector.broadcast %18 : vector<1x32xf32> to vector<16x32xf32>
    %157 = arith.mulf %155, %156 : vector<16x32xf32>
    %158 = vector.broadcast %19 : vector<1x32xf32> to vector<16x32xf32>
    %159 = arith.addf %157, %158 : vector<16x32xf32>
    %c1 = arith.constant 1 : index
    %c0_42 = arith.constant 0 : index
    %c0_43 = arith.constant 0 : index
    %160 = vector.load %arg2[%c1, %c0_42, %c0_43] : memref<2x32x224xbf16, #tpu.memory_space<vmem>>, vector<1x32x224xbf16>
    %161 = vector.shape_cast %160 : vector<1x32x224xbf16> to vector<32x224xbf16>
    %c1_44 = arith.constant 1 : index
    %c0_45 = arith.constant 0 : index
    %c0_46 = arith.constant 0 : index
    %162 = vector.load %arg3[%c1_44, %c0_45, %c0_46] : memref<2x160x32xbf16, #tpu.memory_space<vmem>>, vector<1x160x32xbf16>
    %163 = vector.shape_cast %162 : vector<1x160x32xbf16> to vector<160x32xbf16>
    %c1_47 = arith.constant 1 : index
    %c0_48 = arith.constant 0 : index
    %c0_49 = arith.constant 0 : index
    %164 = vector.load %arg4[%c1_47, %c0_48, %c0_49] : memref<2x4x128xf32, #tpu.memory_space<vmem>>, vector<1x4x128xf32>
    %165 = vector.shape_cast %164 : vector<1x4x128xf32> to vector<4x128xf32>
    %166 = vector.extract_strided_slice %161 {offsets = [0, 0], sizes = [32, 128], strides = [1, 1]} : vector<32x224xbf16> to vector<32x128xbf16>
    %167 = vector.extract_strided_slice %161 {offsets = [0, 128], sizes = [32, 96], strides = [1, 1]} : vector<32x224xbf16> to vector<32x96xbf16>
    %168 = vector.extract_strided_slice %163 {offsets = [0, 0], sizes = [32, 32], strides = [1, 1]} : vector<160x32xbf16> to vector<32x32xbf16>
    %169 = vector.extract_strided_slice %163 {offsets = [32, 0], sizes = [128, 32], strides = [1, 1]} : vector<160x32xbf16> to vector<128x32xbf16>
    %170 = vector.extract_strided_slice %165 {offsets = [0, 0], sizes = [1, 96], strides = [1, 1]} : vector<4x128xf32> to vector<1x96xf32>
    %171 = vector.extract_strided_slice %165 {offsets = [1, 0], sizes = [1, 128], strides = [1, 1]} : vector<4x128xf32> to vector<1x128xf32>
    %172 = vector.extract_strided_slice %165 {offsets = [2, 0], sizes = [1, 32], strides = [1, 1]} : vector<4x128xf32> to vector<1x32xf32>
    %173 = vector.extract_strided_slice %165 {offsets = [2, 32], sizes = [1, 32], strides = [1, 1]} : vector<4x128xf32> to vector<1x32xf32>
    %174 = vector.extract_strided_slice %165 {offsets = [2, 64], sizes = [1, 32], strides = [1, 1]} : vector<4x128xf32> to vector<1x32xf32>
    %175 = vector.extract_strided_slice %165 {offsets = [2, 96], sizes = [1, 32], strides = [1, 1]} : vector<4x128xf32> to vector<1x32xf32>
    %176 = vector.extract_strided_slice %165 {offsets = [3, 0], sizes = [1, 32], strides = [1, 1]} : vector<4x128xf32> to vector<1x32xf32>
    %177 = vector.extract_strided_slice %165 {offsets = [3, 32], sizes = [1, 32], strides = [1, 1]} : vector<4x128xf32> to vector<1x32xf32>
    %178 = arith.truncf %159 : vector<16x32xf32> to vector<16x32xbf16>
    %cst_50 = arith.constant dense<0.000000e+00> : vector<16x96xf32>
    %179 = tpu.matmul %178, %167, %cst_50 {dimension_numbers = #tpu.dot_dimension_numbers<[1], [0], [0], [1], [0, 0, 1, 1], [], []>} : vector<16x32xbf16>, vector<32x96xbf16>, vector<16x96xf32> -> vector<16x96xf32>
    %180 = vector.broadcast %170 : vector<1x96xf32> to vector<16x96xf32>
    %181 = arith.addf %179, %180 : vector<16x96xf32>
    %182 = arith.truncf %181 : vector<16x96xf32> to vector<16x96xbf16>
    %183 = vector.extract_strided_slice %181 {offsets = [0, 32], sizes = [16, 32], strides = [1, 1]} : vector<16x96xf32> to vector<16x32xf32>
    %184 = tpu.transpose %183, [1, 0] : vector<16x32xf32> -> vector<32x16xf32>
    %185 = vector.extract_strided_slice %182 {offsets = [0, 0], sizes = [16, 8], strides = [1, 1]} : vector<16x96xbf16> to vector<16x8xbf16>
    %186 = vector.extract_strided_slice %184 {offsets = [0, 0], sizes = [8, 16], strides = [1, 1]} : vector<32x16xf32> to vector<8x16xf32>
    %187 = arith.truncf %186 : vector<8x16xf32> to vector<8x16xbf16>
    %188 = vector.extract_strided_slice %182 {offsets = [0, 64], sizes = [16, 8], strides = [1, 1]} : vector<16x96xbf16> to vector<16x8xbf16>
    %cst_51 = arith.constant dense<0.000000e+00> : vector<16x16xf32>
    %189 = tpu.matmul %185, %187, %cst_51 {dimension_numbers = #tpu.dot_dimension_numbers<[1], [0], [0], [1], [0, 0, 1, 1], [], []>} : vector<16x8xbf16>, vector<8x16xbf16>, vector<16x16xf32> -> vector<16x16xf32>
    %190 = arith.addf %189, %0 : vector<16x16xf32>
    %cst_52 = arith.constant dense<0xFF800000> : vector<16xf32>
    %191 = vector.multi_reduction <maximumf>, %190, %cst_52 [1] : vector<16x16xf32> to vector<16xf32>
    %192 = vector.shape_cast %191 : vector<16xf32> to vector<16x1xf32>
    %193 = vector.broadcast %192 : vector<16x1xf32> to vector<16x16xf32>
    %194 = arith.subf %190, %193 : vector<16x16xf32>
    %195 = math.exp %194 : vector<16x16xf32>
    %cst_53 = arith.constant dense<0.000000e+00> : vector<16xf32>
    %196 = vector.multi_reduction <add>, %195, %cst_53 [1] : vector<16x16xf32> to vector<16xf32>
    %197 = vector.shape_cast %196 : vector<16xf32> to vector<16x1xf32>
    %198 = tpu.reciprocal %197 {approx = true} : vector<16x1xf32> -> vector<16x1xf32>
    %199 = vector.broadcast %198 : vector<16x1xf32> to vector<16x16xf32>
    %200 = arith.mulf %195, %199 : vector<16x16xf32>
    %201 = arith.truncf %200 : vector<16x16xf32> to vector<16x16xbf16>
    %cst_54 = arith.constant dense<0.000000e+00> : vector<16x8xf32>
    %202 = tpu.matmul %201, %188, %cst_54 {dimension_numbers = #tpu.dot_dimension_numbers<[1], [0], [0], [1], [0, 0, 1, 1], [], []>} : vector<16x16xbf16>, vector<16x8xbf16>, vector<16x8xf32> -> vector<16x8xf32>
    %203 = vector.extract_strided_slice %182 {offsets = [0, 8], sizes = [16, 8], strides = [1, 1]} : vector<16x96xbf16> to vector<16x8xbf16>
    %204 = vector.extract_strided_slice %184 {offsets = [8, 0], sizes = [8, 16], strides = [1, 1]} : vector<32x16xf32> to vector<8x16xf32>
    %205 = arith.truncf %204 : vector<8x16xf32> to vector<8x16xbf16>
    %206 = vector.extract_strided_slice %182 {offsets = [0, 72], sizes = [16, 8], strides = [1, 1]} : vector<16x96xbf16> to vector<16x8xbf16>
    %cst_55 = arith.constant dense<0.000000e+00> : vector<16x16xf32>
    %207 = tpu.matmul %203, %205, %cst_55 {dimension_numbers = #tpu.dot_dimension_numbers<[1], [0], [0], [1], [0, 0, 1, 1], [], []>} : vector<16x8xbf16>, vector<8x16xbf16>, vector<16x16xf32> -> vector<16x16xf32>
    %208 = arith.addf %207, %0 : vector<16x16xf32>
    %cst_56 = arith.constant dense<0xFF800000> : vector<16xf32>
    %209 = vector.multi_reduction <maximumf>, %208, %cst_56 [1] : vector<16x16xf32> to vector<16xf32>
    %210 = vector.shape_cast %209 : vector<16xf32> to vector<16x1xf32>
    %211 = vector.broadcast %210 : vector<16x1xf32> to vector<16x16xf32>
    %212 = arith.subf %208, %211 : vector<16x16xf32>
    %213 = math.exp %212 : vector<16x16xf32>
    %cst_57 = arith.constant dense<0.000000e+00> : vector<16xf32>
    %214 = vector.multi_reduction <add>, %213, %cst_57 [1] : vector<16x16xf32> to vector<16xf32>
    %215 = vector.shape_cast %214 : vector<16xf32> to vector<16x1xf32>
    %216 = tpu.reciprocal %215 {approx = true} : vector<16x1xf32> -> vector<16x1xf32>
    %217 = vector.broadcast %216 : vector<16x1xf32> to vector<16x16xf32>
    %218 = arith.mulf %213, %217 : vector<16x16xf32>
    %219 = arith.truncf %218 : vector<16x16xf32> to vector<16x16xbf16>
    %cst_58 = arith.constant dense<0.000000e+00> : vector<16x8xf32>
    %220 = tpu.matmul %219, %206, %cst_58 {dimension_numbers = #tpu.dot_dimension_numbers<[1], [0], [0], [1], [0, 0, 1, 1], [], []>} : vector<16x16xbf16>, vector<16x8xbf16>, vector<16x8xf32> -> vector<16x8xf32>
    %221 = vector.extract_strided_slice %182 {offsets = [0, 16], sizes = [16, 8], strides = [1, 1]} : vector<16x96xbf16> to vector<16x8xbf16>
    %222 = vector.extract_strided_slice %184 {offsets = [16, 0], sizes = [8, 16], strides = [1, 1]} : vector<32x16xf32> to vector<8x16xf32>
    %223 = arith.truncf %222 : vector<8x16xf32> to vector<8x16xbf16>
    %224 = vector.extract_strided_slice %182 {offsets = [0, 80], sizes = [16, 8], strides = [1, 1]} : vector<16x96xbf16> to vector<16x8xbf16>
    %cst_59 = arith.constant dense<0.000000e+00> : vector<16x16xf32>
    %225 = tpu.matmul %221, %223, %cst_59 {dimension_numbers = #tpu.dot_dimension_numbers<[1], [0], [0], [1], [0, 0, 1, 1], [], []>} : vector<16x8xbf16>, vector<8x16xbf16>, vector<16x16xf32> -> vector<16x16xf32>
    %226 = arith.addf %225, %0 : vector<16x16xf32>
    %cst_60 = arith.constant dense<0xFF800000> : vector<16xf32>
    %227 = vector.multi_reduction <maximumf>, %226, %cst_60 [1] : vector<16x16xf32> to vector<16xf32>
    %228 = vector.shape_cast %227 : vector<16xf32> to vector<16x1xf32>
    %229 = vector.broadcast %228 : vector<16x1xf32> to vector<16x16xf32>
    %230 = arith.subf %226, %229 : vector<16x16xf32>
    %231 = math.exp %230 : vector<16x16xf32>
    %cst_61 = arith.constant dense<0.000000e+00> : vector<16xf32>
    %232 = vector.multi_reduction <add>, %231, %cst_61 [1] : vector<16x16xf32> to vector<16xf32>
    %233 = vector.shape_cast %232 : vector<16xf32> to vector<16x1xf32>
    %234 = tpu.reciprocal %233 {approx = true} : vector<16x1xf32> -> vector<16x1xf32>
    %235 = vector.broadcast %234 : vector<16x1xf32> to vector<16x16xf32>
    %236 = arith.mulf %231, %235 : vector<16x16xf32>
    %237 = arith.truncf %236 : vector<16x16xf32> to vector<16x16xbf16>
    %cst_62 = arith.constant dense<0.000000e+00> : vector<16x8xf32>
    %238 = tpu.matmul %237, %224, %cst_62 {dimension_numbers = #tpu.dot_dimension_numbers<[1], [0], [0], [1], [0, 0, 1, 1], [], []>} : vector<16x16xbf16>, vector<16x8xbf16>, vector<16x8xf32> -> vector<16x8xf32>
    %239 = vector.extract_strided_slice %182 {offsets = [0, 24], sizes = [16, 8], strides = [1, 1]} : vector<16x96xbf16> to vector<16x8xbf16>
    %240 = vector.extract_strided_slice %184 {offsets = [24, 0], sizes = [8, 16], strides = [1, 1]} : vector<32x16xf32> to vector<8x16xf32>
    %241 = arith.truncf %240 : vector<8x16xf32> to vector<8x16xbf16>
    %242 = vector.extract_strided_slice %182 {offsets = [0, 88], sizes = [16, 8], strides = [1, 1]} : vector<16x96xbf16> to vector<16x8xbf16>
    %cst_63 = arith.constant dense<0.000000e+00> : vector<16x16xf32>
    %243 = tpu.matmul %239, %241, %cst_63 {dimension_numbers = #tpu.dot_dimension_numbers<[1], [0], [0], [1], [0, 0, 1, 1], [], []>} : vector<16x8xbf16>, vector<8x16xbf16>, vector<16x16xf32> -> vector<16x16xf32>
    %244 = arith.addf %243, %0 : vector<16x16xf32>
    %cst_64 = arith.constant dense<0xFF800000> : vector<16xf32>
    %245 = vector.multi_reduction <maximumf>, %244, %cst_64 [1] : vector<16x16xf32> to vector<16xf32>
    %246 = vector.shape_cast %245 : vector<16xf32> to vector<16x1xf32>
    %247 = vector.broadcast %246 : vector<16x1xf32> to vector<16x16xf32>
    %248 = arith.subf %244, %247 : vector<16x16xf32>
    %249 = math.exp %248 : vector<16x16xf32>
    %cst_65 = arith.constant dense<0.000000e+00> : vector<16xf32>
    %250 = vector.multi_reduction <add>, %249, %cst_65 [1] : vector<16x16xf32> to vector<16xf32>
    %251 = vector.shape_cast %250 : vector<16xf32> to vector<16x1xf32>
    %252 = tpu.reciprocal %251 {approx = true} : vector<16x1xf32> -> vector<16x1xf32>
    %253 = vector.broadcast %252 : vector<16x1xf32> to vector<16x16xf32>
    %254 = arith.mulf %249, %253 : vector<16x16xf32>
    %255 = arith.truncf %254 : vector<16x16xf32> to vector<16x16xbf16>
    %cst_66 = arith.constant dense<0.000000e+00> : vector<16x8xf32>
    %256 = tpu.matmul %255, %242, %cst_66 {dimension_numbers = #tpu.dot_dimension_numbers<[1], [0], [0], [1], [0, 0, 1, 1], [], []>} : vector<16x16xbf16>, vector<16x8xbf16>, vector<16x8xf32> -> vector<16x8xf32>
    %257 = tpu.concatenate %202, %220, %238, %256 in 1 : vector<16x8xf32>, vector<16x8xf32>, vector<16x8xf32>, vector<16x8xf32> -> vector<16x32xf32>
    %258 = arith.truncf %257 : vector<16x32xf32> to vector<16x32xbf16>
    %cst_67 = arith.constant dense<0.000000e+00> : vector<16x32xf32>
    %259 = tpu.matmul %258, %168, %cst_67 {dimension_numbers = #tpu.dot_dimension_numbers<[1], [0], [0], [1], [0, 0, 1, 1], [], []>} : vector<16x32xbf16>, vector<32x32xbf16>, vector<16x32xf32> -> vector<16x32xf32>
    %260 = vector.broadcast %172 : vector<1x32xf32> to vector<16x32xf32>
    %261 = arith.addf %259, %260 : vector<16x32xf32>
    %262 = arith.addf %159, %261 : vector<16x32xf32>
    %cst_68 = arith.constant dense<0.000000e+00> : vector<16xf32>
    %263 = vector.multi_reduction <add>, %262, %cst_68 [1] : vector<16x32xf32> to vector<16xf32>
    %264 = vector.shape_cast %263 : vector<16xf32> to vector<16x1xf32>
    %cst_69 = arith.constant 3.200000e+01 : f32
    %265 = vector.broadcast %cst_69 : f32 to vector<16x1xf32>
    %266 = arith.divf %264, %265 : vector<16x1xf32>
    %267 = vector.broadcast %266 : vector<16x1xf32> to vector<16x32xf32>
    %268 = arith.subf %262, %267 : vector<16x32xf32>
    %269 = arith.mulf %268, %268 : vector<16x32xf32>
    %cst_70 = arith.constant dense<0.000000e+00> : vector<16xf32>
    %270 = vector.multi_reduction <add>, %269, %cst_70 [1] : vector<16x32xf32> to vector<16xf32>
    %271 = vector.shape_cast %270 : vector<16xf32> to vector<16x1xf32>
    %cst_71 = arith.constant 3.200000e+01 : f32
    %272 = vector.broadcast %cst_71 : f32 to vector<16x1xf32>
    %273 = arith.divf %271, %272 : vector<16x1xf32>
    %274 = vector.broadcast %266 : vector<16x1xf32> to vector<16x32xf32>
    %275 = arith.subf %262, %274 : vector<16x32xf32>
    %cst_72 = arith.constant 9.99999974E-6 : f32
    %276 = vector.broadcast %cst_72 : f32 to vector<16x1xf32>
    %277 = arith.addf %273, %276 : vector<16x1xf32>
    %278 = math.rsqrt %277 : vector<16x1xf32>
    %279 = vector.broadcast %278 : vector<16x1xf32> to vector<16x32xf32>
    %280 = arith.mulf %275, %279 : vector<16x32xf32>
    %281 = vector.broadcast %173 : vector<1x32xf32> to vector<16x32xf32>
    %282 = arith.mulf %280, %281 : vector<16x32xf32>
    %283 = vector.broadcast %174 : vector<1x32xf32> to vector<16x32xf32>
    %284 = arith.addf %282, %283 : vector<16x32xf32>
    %285 = arith.truncf %284 : vector<16x32xf32> to vector<16x32xbf16>
    %cst_73 = arith.constant dense<0.000000e+00> : vector<16x128xf32>
    %286 = tpu.matmul %285, %166, %cst_73 {dimension_numbers = #tpu.dot_dimension_numbers<[1], [0], [0], [1], [0, 0, 1, 1], [], []>} : vector<16x32xbf16>, vector<32x128xbf16>, vector<16x128xf32> -> vector<16x128xf32>
    %287 = vector.broadcast %171 : vector<1x128xf32> to vector<16x128xf32>
    %288 = arith.addf %286, %287 : vector<16x128xf32>
    %cst_74 = arith.constant 0.000000e+00 : f32
    %289 = vector.broadcast %cst_74 : f32 to vector<16x128xf32>
    %290 = arith.maximumf %288, %289 : vector<16x128xf32>
    %291 = arith.truncf %290 : vector<16x128xf32> to vector<16x128xbf16>
    %cst_75 = arith.constant dense<0.000000e+00> : vector<16x32xf32>
    %292 = tpu.matmul %291, %169, %cst_75 {dimension_numbers = #tpu.dot_dimension_numbers<[1], [0], [0], [1], [0, 0, 1, 1], [], []>} : vector<16x128xbf16>, vector<128x32xbf16>, vector<16x32xf32> -> vector<16x32xf32>
    %293 = vector.broadcast %175 : vector<1x32xf32> to vector<16x32xf32>
    %294 = arith.addf %292, %293 : vector<16x32xf32>
    %295 = arith.addf %284, %294 : vector<16x32xf32>
    %cst_76 = arith.constant dense<0.000000e+00> : vector<16xf32>
    %296 = vector.multi_reduction <add>, %295, %cst_76 [1] : vector<16x32xf32> to vector<16xf32>
    %297 = vector.shape_cast %296 : vector<16xf32> to vector<16x1xf32>
    %cst_77 = arith.constant 3.200000e+01 : f32
    %298 = vector.broadcast %cst_77 : f32 to vector<16x1xf32>
    %299 = arith.divf %297, %298 : vector<16x1xf32>
    %300 = vector.broadcast %299 : vector<16x1xf32> to vector<16x32xf32>
    %301 = arith.subf %295, %300 : vector<16x32xf32>
    %302 = arith.mulf %301, %301 : vector<16x32xf32>
    %cst_78 = arith.constant dense<0.000000e+00> : vector<16xf32>
    %303 = vector.multi_reduction <add>, %302, %cst_78 [1] : vector<16x32xf32> to vector<16xf32>
    %304 = vector.shape_cast %303 : vector<16xf32> to vector<16x1xf32>
    %cst_79 = arith.constant 3.200000e+01 : f32
    %305 = vector.broadcast %cst_79 : f32 to vector<16x1xf32>
    %306 = arith.divf %304, %305 : vector<16x1xf32>
    %307 = vector.broadcast %299 : vector<16x1xf32> to vector<16x32xf32>
    %308 = arith.subf %295, %307 : vector<16x32xf32>
    %cst_80 = arith.constant 9.99999974E-6 : f32
    %309 = vector.broadcast %cst_80 : f32 to vector<16x1xf32>
    %310 = arith.addf %306, %309 : vector<16x1xf32>
    %311 = math.rsqrt %310 : vector<16x1xf32>
    %312 = vector.broadcast %311 : vector<16x1xf32> to vector<16x32xf32>
    %313 = arith.mulf %308, %312 : vector<16x32xf32>
    %314 = vector.broadcast %176 : vector<1x32xf32> to vector<16x32xf32>
    %315 = arith.mulf %313, %314 : vector<16x32xf32>
    %316 = vector.broadcast %177 : vector<1x32xf32> to vector<16x32xf32>
    %317 = arith.addf %315, %316 : vector<16x32xf32>
    %c0_81 = arith.constant 0 : index
    %c0_82 = arith.constant 0 : index
    %318 = vector.load %arg5[%c0_81, %c0_82] : memref<16x32xf32, #tpu.memory_space<vmem>>, vector<16x32xf32>
    tpu.vector_store %arg5[%c0_81, %c0_82], %317 {strides = array<i32>} : memref<16x32xf32, #tpu.memory_space<vmem>>, vector<16x32xf32>,
    return
  }
}

</mosaic_0001>

<llo_original>
// kernel: tpu_custom_call.1
$region0: #{tpu_custom_call.1}
  #allocation0 [shape = 'u32[]', space=smem, size = 0x4, offset = 0x4, fixed_abs, tag = 'smem constant byte address 0x4 - core index']
  #allocation1 [shape = 'u32[144,128]{1,0:T(1,128)}', space=vmem, size = 0x12000, scoped, tag = 'internal scratch']
  %s0 = inlined_call_operand.vmem [shape: f32[16,32], index: 0, kind: input, shape index: {}]
  %s1 = inlined_call_operand.vmem [shape: f32[16,16], index: 1, kind: input, shape index: {}]
  %s2 = inlined_call_operand.vmem [shape: bf16[2,32,224], index: 2, kind: input, shape index: {}]
  %s3 = inlined_call_operand.vmem [shape: bf16[2,160,32], index: 3, kind: input, shape index: {}]
  %s4 = inlined_call_operand.vmem [shape: f32[2,4,128], index: 4, kind: input, shape index: {}]
  %s5 = inlined_call_operand.hbm [shape: f32[16,32], index: 5, kind: output, shape index: {}]
  %s6 = sld [smem:[#allocation0]]
  $region30: #{tpu_custom_call.1} parent=0
    _
  %s8 = ssub.s32 1, %s6
  %s9 = scalar_select 0, %s8, %s6
  $region1: #{tpu_custom_call.1} parent=0
    #allocation2 [shape = 'u8[8192]{0}', space=vmem, size = 0x2000, scoped, tag = 'output window, operand 0, single buffered']
    #allocation3 [shape = 's32[1]{0}', space=sflag, size = 0x4, scoped, tag = 'scoped memory for tpu_custom_call.1']
    %10 = vsyncpa [#allocation3], 0
    // Predicated region
    $region2: #{tpu_custom_call.1} parent=1 // pred_check
      _
    $region3: #{tpu_custom_call.1} parent=1 // pred_check_branch
      %12 = sbr.rel (0) target = $region5
    $region4: #{tpu_custom_call.1} parent=1 // pred_region
      _
    $region5: #{tpu_custom_call.1} parent=1 // pred_fallthru
      _
    // Predicated region
    $region6: #{tpu_custom_call.1} parent=1 // pred_check
      _
    $region7: #{tpu_custom_call.1} parent=1 // pred_check_branch
      %14 = sbr.rel (0) target = $region9
    $region8: #{tpu_custom_call.1} parent=1 // pred_region
      _
    $region9: #{tpu_custom_call.1} parent=1 // pred_fallthru
      _
    // Predicated region
    $region10: #{tpu_custom_call.1} parent=1 // pred_check
      _
    $region11: #{tpu_custom_call.1} parent=1 // pred_check_branch
      %16 = sbr.rel (0) target = $region13
    $region12: #{tpu_custom_call.1} parent=1 // pred_region
      _
    $region13: #{tpu_custom_call.1} parent=1 // pred_fallthru
      _
    // Predicated region
    $region14: #{tpu_custom_call.1} parent=1 // pred_check
      _
    $region15: #{tpu_custom_call.1} parent=1 // pred_check_branch
      %18 = sbr.rel (0) target = $region17
    $region16: #{tpu_custom_call.1} parent=1 // pred_region
      _
    $region17: #{tpu_custom_call.1} parent=1 // pred_fallthru
      _
    // Predicated region
    $region18: #{tpu_custom_call.1} parent=1 // pred_check
      _
    $region19: #{tpu_custom_call.1} parent=1 // pred_check_branch
      %20 = sbr.rel (0) target = $region21
    $region20: #{tpu_custom_call.1} parent=1 // pred_region
      _
    $region21: #{tpu_custom_call.1} parent=1 // pred_fallthru
      _
    %v22 = vld [vmem:[%s1] sm:$0xff]
    %v23 = vld [vmem:[%s1 + $0x8] sm:$0xff]
    %v24 = vld [vmem:[%s0] sm:$0xff]
    %v25 = vld [vmem:[%s0 + $0x8] sm:$0xff]
    %v26 = vld [vmem:[%s2] sm:$0xff]
    %v27 = vld [vmem:[%s2 + $0x8] sm:$0xff]
    %v28 = vld [vmem:[%s2 + $0x10] sm:$0xff]
    %v29 = vld [vmem:[%s2 + $0x18] sm:$0xff]
    %v30 = vld [vmem:[%s3] sm:$0xf]
    %v31 = vld [vmem:[%s3 + $0x4] sm:$0xf]
    %v32 = vld [vmem:[%s3 + $0x8] sm:$0xf]
    %v33 = vld [vmem:[%s3 + $0xc] sm:$0xf]
    %v34 = vld [vmem:[%s3 + $0x10] sm:$0xf]
    %v35 = vld [vmem:[%s3 + $0x14] sm:$0xf]
    %v36 = vld [vmem:[%s3 + $0x18] sm:$0xf]
    %v37 = vld [vmem:[%s3 + $0x1c] sm:$0xf]
    %v38 = vld [vmem:[%s3 + $0x20] sm:$0xf]
    %v39 = vld [vmem:[%s3 + $0x24] sm:$0xf]
    %v40 = vld [vmem:[%s3 + $0x28] sm:$0xf]
    %v41 = vld [vmem:[%s3 + $0x2c] sm:$0xf]
    %v42 = vld [vmem:[%s3 + $0x30] sm:$0xf]
    %v43 = vld [vmem:[%s3 + $0x34] sm:$0xf]
    %v44 = vld [vmem:[%s3 + $0x38] sm:$0xf]
    %v45 = vld [vmem:[%s3 + $0x3c] sm:$0xf]
    %v46 = vld [vmem:[%s3 + $0x40] sm:$0xf]
    %v47 = vld [vmem:[%s3 + $0x44] sm:$0xf]
    %v48 = vld [vmem:[%s3 + $0x48] sm:$0xf]
    %v49 = vld [vmem:[%s3 + $0x4c] sm:$0xf]
    %v50 = vld [vmem:[%s4] sm:$0xf]
    %v51 = vpack.c.bf16 %v25, %v24
    %v52 = vlaneseq
    %v53 = vshrl.u32 %v52, 7
    %v54 = vsub.s32 0, %v53
    %v55 = vrot.slane %v50, %v54
    %v60 = vunpack.c.h.b16 %v26
    %v61 = vunpack.c.h.b16 %v27
    %v62 = vunpack.c.h.b16 %v28
    %v63 = vunpack.c.h.b16 %v29
    %v64 = vpack.c.b16 %v61, %v60
    %v65 = vpack.c.b16 %v63, %v62
    %vm68 = vcmask 261120
    %v70 = vsel %vm68, %v51, 0
    %72 = vmatprep.subr.bf16.mxu0 0
    %73 = vmatpush1.bf16.msra.mxu0 %v64
    %74 = vmatprep.subr.bf16.mxu0 0
    %75 = vmatpush1.bf16.msra.mxu0 %v65
    %76 = vmatprep.subr.bf16.mxu0 0
    %77 = vmatpush1.bf16.msra.mxu0 0
    %78 = vmatprep.subr.bf16.mxu0 0
    %79 = vmatpush1.bf16.msra.mxu0 0
    %80 = vmatprep.subr.bf16.mxu0 0
    %81 = vmatpush1.bf16.msra.mxu0 0
    %82 = vmatprep.subr.bf16.mxu0 0
    %83 = vmatpush1.bf16.msra.mxu0 0
    %84 = vmatprep.subr.bf16.mxu0 0
    %85 = vmatpush1.bf16.msra.mxu0 0
    %86 = vmatprep.subr.bf16.mxu0 0
    %87 = vmatpush1.bf16.msra.mxu0 0
    %88 = vmatprep.subr.bf16.mxu0 0
    %89 = vmatpush1.bf16.msra.mxu0 0
    %90 = vmatprep.subr.bf16.mxu0 0
    %91 = vmatpush1.bf16.msra.mxu0 0
    %92 = vmatprep.subr.bf16.mxu0 0
    %93 = vmatpush1.bf16.msra.mxu0 0
    %94 = vmatprep.subr.bf16.mxu0 0
    %95 = vmatpush1.bf16.msra.mxu0 0
    %96 = vmatprep.subr.bf16.mxu0 0
    %97 = vmatpush1.bf16.msra.mxu0 0
    %98 = vmatprep.subr.bf16.mxu0 0
    %99 = vmatpush1.bf16.msra.mxu0 0
    %100 = vmatprep.subr.bf16.mxu0 0
    %101 = vmatpush1.bf16.msra.mxu0 0
    %102 = vmatprep.subr.bf16.mxu0 0
    %103 = vmatpush1.bf16.msra.mxu0 0
    %104 = vmatprep.mubr.bf16.mxu0 0
    %105 = vmatmul.mubr.bf16.gmra.mrb[0].mxu0 %v70
    %v106 = vpop.f32.mrb[0].mxu0
    %v107 = vadd.f32 %v55, %v106
    %v108 = vpop.f32.mrb[0].mxu0
    %v109 = vpop.f32.mrb[0].mxu0
    %v110 = vadd.f32 %v55, %v109
    %v111 = vpop.f32.mrb[0].mxu0
    %112 = vdwg.mxu0
    %v113 = vpack.c.bf16 %v110, %v107
    %116 = vrot.lane.b32.xlu0 %v107, 96
    %v117 = vpop.permute.xlu0 %116
    %118 = vrot.lane.b32.xlu0 %v110, 96
    %v119 = vpop.permute.xlu0 %118
    %122 = vxpose.xlu0.b32.start [1/16] %v117, 128
    %123 = vxpose.xlu0.b32.cont [2/16] %v119, 128
    %124 = vxpose.xlu0.b32.cont [3/16] 0.0, 128
    %125 = vxpose.xlu0.b32.cont [4/16] 0.0, 128
    %126 = vxpose.xlu0.b32.cont [5/16] 0.0, 128
    %127 = vxpose.xlu0.b32.cont [6/16] 0.0, 128
    %128 = vxpose.xlu0.b32.cont [7/16] 0.0, 128
    %129 = vxpose.xlu0.b32.cont [8/16] 0.0, 128
    %130 = vxpose.xlu0.b32.cont [9/16] 0.0, 128
    %131 = vxpose.xlu0.b32.cont [10/16] 0.0, 128
    %132 = vxpose.xlu0.b32.cont [11/16] 0.0, 128
    %133 = vxpose.xlu0.b32.cont [12/16] 0.0, 128
    %134 = vxpose.xlu0.b32.cont [13/16] 0.0, 128
    %135 = vxpose.xlu0.b32.cont [14/16] 0.0, 128
    %136 = vxpose.xlu0.b32.cont [15/16] 0.0, 128
    %137 = vxpose.xlu0.b32.end [16/16] 0.0, 128
    %v138 = vpop.trf.xlu0
    %v139 = vpop.trf.xlu0
    %v140 = vpop.trf.xlu0
    %v141 = vpop.trf.xlu0
    %v142 = vpop.trf.xlu0
    %v143 = vpop.trf.xlu0
    %v144 = vpop.trf.xlu0
    %v145 = vpop.trf.xlu0
    %v146 = vpop.trf.xlu0
    %v147 = vpop.trf.xlu0
    %v148 = vpop.trf.xlu0
    %v149 = vpop.trf.xlu0
    %v150 = vpop.trf.xlu0
    %v151 = vpop.trf.xlu0
    %v152 = vpop.trf.xlu0
    %v153 = vpop.trf.xlu0
    %v154 = vpack.c.bf16 %v138, %v138
    %vm155 = vcmask 64512
    %v157 = vsel %vm155, %v113, 0
    %vm159 = vcmask 1043456
    %v161 = vsel %vm159, %v154, 0
    %163 = vmatprep.subr.bf16.mxu0 0
    %164 = vmatpush1.bf16.msra.mxu0 %v161
    %165 = vmatprep.subr.bf16.mxu0 0
    %166 = vmatpush1.bf16.msra.mxu0 0
    %167 = vmatprep.subr.bf16.mxu0 0
    %168 = vmatpush1.bf16.msra.mxu0 0
    %169 = vmatprep.subr.bf16.mxu0 0
    %170 = vmatpush1.bf16.msra.mxu0 0
    %171 = vmatprep.subr.bf16.mxu0 0
    %172 = vmatpush1.bf16.msra.mxu0 0
    %173 = vmatprep.subr.bf16.mxu0 0
    %174 = vmatpush1.bf16.msra.mxu0 0
    %175 = vmatprep.subr.bf16.mxu0 0
    %176 = vmatpush1.bf16.msra.mxu0 0
    %177 = vmatprep.subr.bf16.mxu0 0
    %178 = vmatpush1.bf16.msra.mxu0 0
    %179 = vmatprep.subr.bf16.mxu0 0
    %180 = vmatpush1.bf16.msra.mxu0 0
    %181 = vmatprep.subr.bf16.mxu0 0
    %182 = vmatpush1.bf16.msra.mxu0 0
    %183 = vmatprep.subr.bf16.mxu0 0
    %184 = vmatpush1.bf16.msra.mxu0 0
    %185 = vmatprep.subr.bf16.mxu0 0
    %186 = vmatpush1.bf16.msra.mxu0 0
    %187 = vmatprep.subr.bf16.mxu0 0
    %188 = vmatpush1.bf16.msra.mxu0 0
    %189 = vmatprep.subr.bf16.mxu0 0
    %190 = vmatpush1.bf16.msra.mxu0 0
    %191 = vmatprep.subr.bf16.mxu0 0
    %192 = vmatpush1.bf16.msra.mxu0 0
    %193 = vmatprep.subr.bf16.mxu0 0
    %194 = vmatpush1.bf16.msra.mxu0 0
    %195 = vmatprep.mubr.bf16.mxu0 0
    %196 = vmatmul.mubr.bf16.gmra.mrb[0].mxu0 %v157
    %v197 = vpop.f32.mrb[0].mxu0
    %v198 = vadd.f32 %v22, %v197
    %v199 = vpop.f32.mrb[0].mxu0
    %v200 = vpop.f32.mrb[0].mxu0
    %v201 = vadd.f32 %v23, %v200
    %v202 = vpop.f32.mrb[0].mxu0
    %203 = vdwg.mxu0
    %vm204 = vcmask 130048
    %v205 = vsel %vm204, %v198, -inf
    %206 = vmax.xlane.f32.xlu0 %v205
    %v207 = vpop.xlane.xlu0 %206
    %v208 = vsel %vm204, %v201, -inf
    %209 = vmax.xlane.f32.xlu0 %v208
    %v210 = vpop.xlane.xlu0 %209
    %v211 = vsub.f32 %v198, %v207
    %v212 = vsub.f32 %v201, %v210
    %v213 = vmul.f32 %v211, 1.442695
    %v214 = vpow.pop %v213
    %v215 = vmul.f32 %v212, 1.442695
    %v216 = vpow.pop %v215
    %v217 = vsel %vm204, %v214, 0.0
    %218 = vadd.xlane.f32.xlu0 %v217
    %v219 = vpop.xlane.xlu0 %218
    %v220 = vsel %vm204, %v216, 0.0
    %221 = vadd.xlane.f32.xlu0 %v220
    %v222 = vpop.xlane.xlu0 %221
    %v223 = vrcp.pop %v219
    %v224 = vrcp.pop %v222
    %v225 = vmul.f32 %v214, %v223
    %v226 = vmul.f32 %v216, %v224
    %v227 = vpack.c.bf16 %v226, %v225
    %229 = vrot.lane.b32.xlu0 %v113, 64
    %v230 = vpop.permute.xlu0 %229
    %v233 = vsel %vm204, %v227, 0
    %235 = vmatprep.subr.bf16.mxu0 0
    %236 = vmatpush1.bf16.msra.mxu0 %v230
    %237 = vmatprep.subr.bf16.mxu0 0
    %238 = vmatpush1.bf16.msra.mxu0 0
    %239 = vmatprep.subr.bf16.mxu0 0
    %240 = vmatpush1.bf16.msra.mxu0 0
    %241 = vmatprep.subr.bf16.mxu0 0
    %242 = vmatpush1.bf16.msra.mxu0 0
    %243 = vmatprep.subr.bf16.mxu0 0
    %244 = vmatpush1.bf16.msra.mxu0 0
    %245 = vmatprep.subr.bf16.mxu0 0
    %246 = vmatpush1.bf16.msra.mxu0 0
    %247 = vmatprep.subr.bf16.mxu0 0
    %248 = vmatpush1.bf16.msra.mxu0 0
    %249 = vmatprep.subr.bf16.mxu0 0
    %250 = vmatpush1.bf16.msra.mxu0 0
    %251 = vmatprep.subr.bf16.mxu0 0
    %252 = vmatpush1.bf16.msra.mxu0 0
    %253 = vmatprep.subr.bf16.mxu0 0
    %254 = vmatpush1.bf16.msra.mxu0 0
    %255 = vmatprep.subr.bf16.mxu0 0
    %256 = vmatpush1.bf16.msra.mxu0 0
    %257 = vmatprep.subr.bf16.mxu0 0
    %258 = vmatpush1.bf16.msra.mxu0 0
    %259 = vmatprep.subr.bf16.mxu0 0
    %260 = vmatpush1.bf16.msra.mxu0 0
    %261 = vmatprep.subr.bf16.mxu0 0
    %262 = vmatpush1.bf16.msra.mxu0 0
    %263 = vmatprep.subr.bf16.mxu0 0
    %264 = vmatpush1.bf16.msra.mxu0 0
    %265 = vmatprep.subr.bf16.mxu0 0
    %266 = vmatpush1.bf16.msra.mxu0 0
    %267 = vmatprep.mubr.bf16.mxu0 0
    %268 = vmatmul.mubr.bf16.gmra.mrb[0].mxu0 %v233
    %v269 = vpop.f32.mrb[0].mxu0
    %v270 = vadd.f32 0.0, %v269
    %v271 = vpop.f32.mrb[0].mxu0
    %v272 = vpop.f32.mrb[0].mxu0
    %v273 = vadd.f32 0.0, %v272
    %v274 = vpop.f32.mrb[0].mxu0
    %275 = vdwg.mxu0
    %v276 = vpack.c.bf16 %v139, %v139
    %277 = vrot.lane.b32.xlu0 %v113, 120
    %v278 = vpop.permute.xlu0 %277
    %v280 = vsel %vm155, %v278, 0
    %v283 = vsel %vm159, %v276, 0
    %285 = vmatprep.subr.bf16.mxu0 0
    %286 = vmatpush1.bf16.msra.mxu0 %v283
    %287 = vmatprep.subr.bf16.mxu0 0
    %288 = vmatpush1.bf16.msra.mxu0 0
    %289 = vmatprep.subr.bf16.mxu0 0
    %290 = vmatpush1.bf16.msra.mxu0 0
    %291 = vmatprep.subr.bf16.mxu0 0
    %292 = vmatpush1.bf16.msra.mxu0 0
    %293 = vmatprep.subr.bf16.mxu0 0
    %294 = vmatpush1.bf16.msra.mxu0 0
    %295 = vmatprep.subr.bf16.mxu0 0
    %296 = vmatpush1.bf16.msra.mxu0 0
    %297 = vmatprep.subr.bf16.mxu0 0
    %298 = vmatpush1.bf16.msra.mxu0 0
    %299 = vmatprep.subr.bf16.mxu0 0
    %300 = vmatpush1.bf16.msra.mxu0 0
    %301 = vmatprep.subr.bf16.mxu0 0
    %302 = vmatpush1.bf16.msra.mxu0 0
    %303 = vmatprep.subr.bf16.mxu0 0
    %304 = vmatpush1.bf16.msra.mxu0 0
    %305 = vmatprep.subr.bf16.mxu0 0
    %306 = vmatpush1.bf16.msra.mxu0 0
    %307 = vmatprep.subr.bf16.mxu0 0
    %308 = vmatpush1.bf16.msra.mxu0 0
    %309 = vmatprep.subr.bf16.mxu0 0
    %310 = vmatpush1.bf16.msra.mxu0 0
    %311 = vmatprep.subr.bf16.mxu0 0
    %312 = vmatpush1.bf16.msra.mxu0 0
    %313 = vmatprep.subr.bf16.mxu0 0
    %314 = vmatpush1.bf16.msra.mxu0 0
    %315 = vmatprep.subr.bf16.mxu0 0
    %316 = vmatpush1.bf16.msra.mxu0 0
    %317 = vmatprep.mubr.bf16.mxu0 0
    %318 = vmatmul.mubr.bf16.gmra.mrb[0].mxu0 %v280
    %v319 = vpop.f32.mrb[0].mxu0
    %v320 = vadd.f32 %v22, %v319
    %v321 = vpop.f32.mrb[0].mxu0
    %v322 = vpop.f32.mrb[0].mxu0
    %v323 = vadd.f32 %v23, %v322
    %v324 = vpop.f32.mrb[0].mxu0
    %325 = vdwg.mxu0
    %v326 = vsel %vm204, %v320, -inf
    %327 = vmax.xlane.f32.xlu0 %v326
    %v328 = vpop.xlane.xlu0 %327
    %v329 = vsel %vm204, %v323, -inf
    %330 = vmax.xlane.f32.xlu0 %v329
    %v331 = vpop.xlane.xlu0 %330
    %v332 = vsub.f32 %v320, %v328
    %v333 = vsub.f32 %v323, %v331
    %v334 = vmul.f32 %v332, 1.442695
    %v335 = vpow.pop %v334
    %v336 = vmul.f32 %v333, 1.442695
    %v337 = vpow.pop %v336
    %v338 = vsel %vm204, %v335, 0.0
    %339 = vadd.xlane.f32.xlu0 %v338
    %v340 = vpop.xlane.xlu0 %339
    %v341 = vsel %vm204, %v337, 0.0
    %342 = vadd.xlane.f32.xlu0 %v341
    %v343 = vpop.xlane.xlu0 %342
    %v344 = vrcp.pop %v340
    %v345 = vrcp.pop %v343
    %v346 = vmul.f32 %v335, %v344
    %v347 = vmul.f32 %v337, %v345
    %v348 = vpack.c.bf16 %v347, %v346
    %349 = vrot.lane.b32.xlu0 %v113, 56
    %v350 = vpop.permute.xlu0 %349
    %v353 = vsel %vm204, %v348, 0
    %355 = vmatprep.subr.bf16.mxu0 0
    %356 = vmatpush1.bf16.msra.mxu0 %v350
    %357 = vmatprep.subr.bf16.mxu0 0
    %358 = vmatpush1.bf16.msra.mxu0 0
    %359 = vmatprep.subr.bf16.mxu0 0
    %360 = vmatpush1.bf16.msra.mxu0 0
    %361 = vmatprep.subr.bf16.mxu0 0
    %362 = vmatpush1.bf16.msra.mxu0 0
    %363 = vmatprep.subr.bf16.mxu0 0
    %364 = vmatpush1.bf16.msra.mxu0 0
    %365 = vmatprep.subr.bf16.mxu0 0
    %366 = vmatpush1.bf16.msra.mxu0 0
    %367 = vmatprep.subr.bf16.mxu0 0
    %368 = vmatpush1.bf16.msra.mxu0 0
    %369 = vmatprep.subr.bf16.mxu0 0
    %370 = vmatpush1.bf16.msra.mxu0 0
    %371 = vmatprep.subr.bf16.mxu0 0
    %372 = vmatpush1.bf16.msra.mxu0 0
    %373 = vmatprep.subr.bf16.mxu0 0
    %374 = vmatpush1.bf16.msra.mxu0 0
    %375 = vmatprep.subr.bf16.mxu0 0
    %376 = vmatpush1.bf16.msra.mxu0 0
    %377 = vmatprep.subr.bf16.mxu0 0
    %378 = vmatpush1.bf16.msra.mxu0 0
    %379 = vmatprep.subr.bf16.mxu0 0
    %380 = vmatpush1.bf16.msra.mxu0 0
    %381 = vmatprep.subr.bf16.mxu0 0
    %382 = vmatpush1.bf16.msra.mxu0 0
    %383 = vmatprep.subr.bf16.mxu0 0
    %384 = vmatpush1.bf16.msra.mxu0 0
    %385 = vmatprep.subr.bf16.mxu0 0
    %386 = vmatpush1.bf16.msra.mxu0 0
    %387 = vmatprep.mubr.bf16.mxu0 0
    %388 = vmatmul.mubr.bf16.gmra.mrb[0].mxu0 %v353
    %v389 = vpop.f32.mrb[0].mxu0
    %v390 = vadd.f32 0.0, %v389
    %v391 = vpop.f32.mrb[0].mxu0
    %v392 = vpop.f32.mrb[0].mxu0
    %v393 = vadd.f32 0.0, %v392
    %v394 = vpop.f32.mrb[0].mxu0
    %395 = vdwg.mxu0
    %v396 = vpack.c.bf16 %v140, %v140
    %397 = vrot.lane.b32.xlu0 %v113, 112
    %v398 = vpop.permute.xlu0 %397
    %v400 = vsel %vm155, %v398, 0
    %v403 = vsel %vm159, %v396, 0
    %405 = vmatprep.subr.bf16.mxu0 0
    %406 = vmatpush1.bf16.msra.mxu0 %v403
    %407 = vmatprep.subr.bf16.mxu0 0
    %408 = vmatpush1.bf16.msra.mxu0 0
    %409 = vmatprep.subr.bf16.mxu0 0
    %410 = vmatpush1.bf16.msra.mxu0 0
    %411 = vmatprep.subr.bf16.mxu0 0
    %412 = vmatpush1.bf16.msra.mxu0 0
    %413 = vmatprep.subr.bf16.mxu0 0
    %414 = vmatpush1.bf16.msra.mxu0 0
    %415 = vmatprep.subr.bf16.mxu0 0
    %416 = vmatpush1.bf16.msra.mxu0 0
    %417 = vmatprep.subr.bf16.mxu0 0
    %418 = vmatpush1.bf16.msra.mxu0 0
    %419 = vmatprep.subr.bf16.mxu0 0
    %420 = vmatpush1.bf16.msra.mxu0 0
    %421 = vmatprep.subr.bf16.mxu0 0
    %422 = vmatpush1.bf16.msra.mxu0 0
    %423 = vmatprep.subr.bf16.mxu0 0
    %424 = vmatpush1.bf16.msra.mxu0 0
    %425 = vmatprep.subr.bf16.mxu0 0
    %426 = vmatpush1.bf16.msra.mxu0 0
    %427 = vmatprep.subr.bf16.mxu0 0
    %428 = vmatpush1.bf16.msra.mxu0 0
    %429 = vmatprep.subr.bf16.mxu0 0
    %430 = vmatpush1.bf16.msra.mxu0 0
    %431 = vmatprep.subr.bf16.mxu0 0
    %432 = vmatpush1.bf16.msra.mxu0 0
    %433 = vmatprep.subr.bf16.mxu0 0
    %434 = vmatpush1.bf16.msra.mxu0 0
    %435 = vmatprep.subr.bf16.mxu0 0
    %436 = vmatpush1.bf16.msra.mxu0 0
    %437 = vmatprep.mubr.bf16.mxu0 0
    %438 = vmatmul.mubr.bf16.gmra.mrb[0].mxu0 %v400
    %v439 = vpop.f32.mrb[0].mxu0
    %v440 = vadd.f32 %v22, %v439
    %v441 = vpop.f32.mrb[0].mxu0
    %v442 = vpop.f32.mrb[0].mxu0
    %v443 = vadd.f32 %v23, %v442
    %v444 = vpop.f32.mrb[0].mxu0
    %445 = vdwg.mxu0
    %v446 = vsel %vm204, %v440, -inf
    %447 = vmax.xlane.f32.xlu0 %v446
    %v448 = vpop.xlane.xlu0 %447
    %v449 = vsel %vm204, %v443, -inf
    %450 = vmax.xlane.f32.xlu0 %v449
    %v451 = vpop.xlane.xlu0 %450
    %v452 = vsub.f32 %v440, %v448
    %v453 = vsub.f32 %v443, %v451
    %v454 = vmul.f32 %v452, 1.442695
    %v455 = vpow.pop %v454
    %v456 = vmul.f32 %v453, 1.442695
    %v457 = vpow.pop %v456
    %v458 = vsel %vm204, %v455, 0.0
    %459 = vadd.xlane.f32.xlu0 %v458
    %v460 = vpop.xlane.xlu0 %459
    %v461 = vsel %vm204, %v457, 0.0
    %462 = vadd.xlane.f32.xlu0 %v461
    %v463 = vpop.xlane.xlu0 %462
    %v464 = vrcp.pop %v460
    %v465 = vrcp.pop %v463
    %v466 = vmul.f32 %v455, %v464
    %v467 = vmul.f32 %v457, %v465
    %v468 = vpack.c.bf16 %v467, %v466
    %469 = vrot.lane.b32.xlu0 %v113, 48
    %v470 = vpop.permute.xlu0 %469
    %v473 = vsel %vm204, %v468, 0
    %475 = vmatprep.subr.bf16.mxu0 0
    %476 = vmatpush1.bf16.msra.mxu0 %v470
    %477 = vmatprep.subr.bf16.mxu0 0
    %478 = vmatpush1.bf16.msra.mxu0 0
    %479 = vmatprep.subr.bf16.mxu0 0
    %480 = vmatpush1.bf16.msra.mxu0 0
    %481 = vmatprep.subr.bf16.mxu0 0
    %482 = vmatpush1.bf16.msra.mxu0 0
    %483 = vmatprep.subr.bf16.mxu0 0
    %484 = vmatpush1.bf16.msra.mxu0 0
    %485 = vmatprep.subr.bf16.mxu0 0
    %486 = vmatpush1.bf16.msra.mxu0 0
    %487 = vmatprep.subr.bf16.mxu0 0
    %488 = vmatpush1.bf16.msra.mxu0 0
    %489 = vmatprep.subr.bf16.mxu0 0
    %490 = vmatpush1.bf16.msra.mxu0 0
    %491 = vmatprep.subr.bf16.mxu0 0
    %492 = vmatpush1.bf16.msra.mxu0 0
    %493 = vmatprep.subr.bf16.mxu0 0
    %494 = vmatpush1.bf16.msra.mxu0 0
    %495 = vmatprep.subr.bf16.mxu0 0
    %496 = vmatpush1.bf16.msra.mxu0 0
    %497 = vmatprep.subr.bf16.mxu0 0
    %498 = vmatpush1.bf16.msra.mxu0 0
    %499 = vmatprep.subr.bf16.mxu0 0
    %500 = vmatpush1.bf16.msra.mxu0 0
    %501 = vmatprep.subr.bf16.mxu0 0
    %502 = vmatpush1.bf16.msra.mxu0 0
    %503 = vmatprep.subr.bf16.mxu0 0
    %504 = vmatpush1.bf16.msra.mxu0 0
    %505 = vmatprep.subr.bf16.mxu0 0
    %506 = vmatpush1.bf16.msra.mxu0 0
    %507 = vmatprep.mubr.bf16.mxu0 0
    %508 = vmatmul.mubr.bf16.gmra.mrb[0].mxu0 %v473
    %v509 = vpop.f32.mrb[0].mxu0
    %v510 = vadd.f32 0.0, %v509
    %v511 = vpop.f32.mrb[0].mxu0
    %v512 = vpop.f32.mrb[0].mxu0
    %v513 = vadd.f32 0.0, %v512
    %v514 = vpop.f32.mrb[0].mxu0
    %515 = vdwg.mxu0
    %v516 = vpack.c.bf16 %v141, %v141
    %517 = vrot.lane.b32.xlu0 %v113, 104
    %v518 = vpop.permute.xlu0 %517
    %v520 = vsel %vm155, %v518, 0
    %v523 = vsel %vm159, %v516, 0
    %525 = vmatprep.subr.bf16.mxu0 0
    %526 = vmatpush1.bf16.msra.mxu0 %v523
    %527 = vmatprep.subr.bf16.mxu0 0
    %528 = vmatpush1.bf16.msra.mxu0 0
    %529 = vmatprep.subr.bf16.mxu0 0
    %530 = vmatpush1.bf16.msra.mxu0 0
    %531 = vmatprep.subr.bf16.mxu0 0
    %532 = vmatpush1.bf16.msra.mxu0 0
    %533 = vmatprep.subr.bf16.mxu0 0
    %534 = vmatpush1.bf16.msra.mxu0 0
    %535 = vmatprep.subr.bf16.mxu0 0
    %536 = vmatpush1.bf16.msra.mxu0 0
    %537 = vmatprep.subr.bf16.mxu0 0
    %538 = vmatpush1.bf16.msra.mxu0 0
    %539 = vmatprep.subr.bf16.mxu0 0
    %540 = vmatpush1.bf16.msra.mxu0 0
    %541 = vmatprep.subr.bf16.mxu0 0
    %542 = vmatpush1.bf16.msra.mxu0 0
    %543 = vmatprep.subr.bf16.mxu0 0
    %544 = vmatpush1.bf16.msra.mxu0 0
    %545 = vmatprep.subr.bf16.mxu0 0
    %546 = vmatpush1.bf16.msra.mxu0 0
    %547 = vmatprep.subr.bf16.mxu0 0
    %548 = vmatpush1.bf16.msra.mxu0 0
    %549 = vmatprep.subr.bf16.mxu0 0
    %550 = vmatpush1.bf16.msra.mxu0 0
    %551 = vmatprep.subr.bf16.mxu0 0
    %552 = vmatpush1.bf16.msra.mxu0 0
    %553 = vmatprep.subr.bf16.mxu0 0
    %554 = vmatpush1.bf16.msra.mxu0 0
    %555 = vmatprep.subr.bf16.mxu0 0
    %556 = vmatpush1.bf16.msra.mxu0 0
    %557 = vmatprep.mubr.bf16.mxu0 0
    %558 = vmatmul.mubr.bf16.gmra.mrb[0].mxu0 %v520
    %v559 = vpop.f32.mrb[0].mxu0
    %v560 = vadd.f32 %v22, %v559
    %v561 = vpop.f32.mrb[0].mxu0
    %v562 = vpop.f32.mrb[0].mxu0
    %v563 = vadd.f32 %v23, %v562
    %v564 = vpop.f32.mrb[0].mxu0
    %565 = vdwg.mxu0
    %v566 = vsel %vm204, %v560, -inf
    %567 = vmax.xlane.f32.xlu0 %v566
    %v568 = vpop.xlane.xlu0 %567
    %v569 = vsel %vm204, %v563, -inf
    %570 = vmax.xlane.f32.xlu0 %v569
    %v571 = vpop.xlane.xlu0 %570
    %v572 = vsub.f32 %v560, %v568
    %v573 = vsub.f32 %v563, %v571
    %v574 = vmul.f32 %v572, 1.442695
    %v575 = vpow.pop %v574
    %v576 = vmul.f32 %v573, 1.442695
    %v577 = vpow.pop %v576
    %v578 = vsel %vm204, %v575, 0.0
    %579 = vadd.xlane.f32.xlu0 %v578
    %v580 = vpop.xlane.xlu0 %579
    %v581 = vsel %vm204, %v577, 0.0
    %582 = vadd.xlane.f32.xlu0 %v581
    %v583 = vpop.xlane.xlu0 %582
    %v584 = vrcp.pop %v580
    %v585 = vrcp.pop %v583
    %v586 = vmul.f32 %v575, %v584
    %v587 = vmul.f32 %v577, %v585
    %v588 = vpack.c.bf16 %v587, %v586
    %589 = vrot.lane.b32.xlu0 %v113, 40
    %v590 = vpop.permute.xlu0 %589
    %v593 = vsel %vm204, %v588, 0
    %595 = vmatprep.subr.bf16.mxu0 0
    %596 = vmatpush1.bf16.msra.mxu0 %v590
    %597 = vmatprep.subr.bf16.mxu0 0
    %598 = vmatpush1.bf16.msra.mxu0 0
    %599 = vmatprep.subr.bf16.mxu0 0
    %600 = vmatpush1.bf16.msra.mxu0 0
    %601 = vmatprep.subr.bf16.mxu0 0
    %602 = vmatpush1.bf16.msra.mxu0 0
    %603 = vmatprep.subr.bf16.mxu0 0
    %604 = vmatpush1.bf16.msra.mxu0 0
    %605 = vmatprep.subr.bf16.mxu0 0
    %606 = vmatpush1.bf16.msra.mxu0 0
    %607 = vmatprep.subr.bf16.mxu0 0
    %608 = vmatpush1.bf16.msra.mxu0 0
    %609 = vmatprep.subr.bf16.mxu0 0
    %610 = vmatpush1.bf16.msra.mxu0 0
    %611 = vmatprep.subr.bf16.mxu0 0
    %612 = vmatpush1.bf16.msra.mxu0 0
    %613 = vmatprep.subr.bf16.mxu0 0
    %614 = vmatpush1.bf16.msra.mxu0 0
    %615 = vmatprep.subr.bf16.mxu0 0
    %616 = vmatpush1.bf16.msra.mxu0 0
    %617 = vmatprep.subr.bf16.mxu0 0
    %618 = vmatpush1.bf16.msra.mxu0 0
    %619 = vmatprep.subr.bf16.mxu0 0
    %620 = vmatpush1.bf16.msra.mxu0 0
    %621 = vmatprep.subr.bf16.mxu0 0
    %622 = vmatpush1.bf16.msra.mxu0 0
    %623 = vmatprep.subr.bf16.mxu0 0
    %624 = vmatpush1.bf16.msra.mxu0 0
    %625 = vmatprep.subr.bf16.mxu0 0
    %626 = vmatpush1.bf16.msra.mxu0 0
    %627 = vmatprep.mubr.bf16.mxu0 0
    %628 = vmatmul.mubr.bf16.gmra.mrb[0].mxu0 %v593
    %v629 = vpop.f32.mrb[0].mxu0
    %v630 = vadd.f32 0.0, %v629
    %v631 = vpop.f32.mrb[0].mxu0
    %v632 = vpop.f32.mrb[0].mxu0
    %v633 = vadd.f32 0.0, %v632
    %v634 = vpop.f32.mrb[0].mxu0
    %635 = vdwg.mxu0
    %638 = vrot.lane.b32.xlu0 %v390, 8
    %v639 = vpop.permute.xlu0 %638
    %640 = vrot.lane.b32.xlu0 %v393, 8
    %v641 = vpop.permute.xlu0 %640
    %646 = vrot.lane.b32.xlu0 %v510, 16
    %v647 = vpop.permute.xlu0 %646
    %648 = vrot.lane.b32.xlu0 %v513, 16
    %v649 = vpop.permute.xlu0 %648
    %654 = vrot.lane.b32.xlu0 %v630, 24
    %v655 = vpop.permute.xlu0 %654
    %656 = vrot.lane.b32.xlu0 %v633, 24
    %v657 = vpop.permute.xlu0 %656
    %v660 = vsel %vm155, %v270, %v639
    %v661 = vsel %vm155, %v273, %v641
    %v662 = vsel %vm204, %v660, %v647
    %v663 = vsel %vm204, %v661, %v649
    %vm664 = vcmask 195584
    %v665 = vsel %vm664, %v662, %v655
    %v666 = vsel %vm664, %v663, %v657
    %v667 = vpack.c.bf16 %v666, %v665
    %v668 = vlaneseq
    %v669 = vshrl.u32 %v668, 7
    %v670 = vsub.s32 2, %v669
    %v671 = vrot.slane %v50, %v670
    %v676 = vunpack.c.l.b16 %v30
    %v677 = vunpack.c.l.b16 %v31
    %v678 = vunpack.c.l.b16 %v32
    %v679 = vunpack.c.l.b16 %v33
    %v680 = vpack.c.b16 %v677, %v676
    %v681 = vpack.c.b16 %v679, %v678
    %v685 = vsel %vm68, %v667, 0
    %687 = vmatprep.subr.bf16.mxu0 0
    %688 = vmatpush1.bf16.msra.mxu0 %v680
    %689 = vmatprep.subr.bf16.mxu0 0
    %690 = vmatpush1.bf16.msra.mxu0 %v681
    %691 = vmatprep.subr.bf16.mxu0 0
    %692 = vmatpush1.bf16.msra.mxu0 0
    %693 = vmatprep.subr.bf16.mxu0 0
    %694 = vmatpush1.bf16.msra.mxu0 0
    %695 = vmatprep.subr.bf16.mxu0 0
    %696 = vmatpush1.bf16.msra.mxu0 0
    %697 = vmatprep.subr.bf16.mxu0 0
    %698 = vmatpush1.bf16.msra.mxu0 0
    %699 = vmatprep.subr.bf16.mxu0 0
    %700 = vmatpush1.bf16.msra.mxu0 0
    %701 = vmatprep.subr.bf16.mxu0 0
    %702 = vmatpush1.bf16.msra.mxu0 0
    %703 = vmatprep.subr.bf16.mxu0 0
    %704 = vmatpush1.bf16.msra.mxu0 0
    %705 = vmatprep.subr.bf16.mxu0 0
    %706 = vmatpush1.bf16.msra.mxu0 0
    %707 = vmatprep.subr.bf16.mxu0 0
    %708 = vmatpush1.bf16.msra.mxu0 0
    %709 = vmatprep.subr.bf16.mxu0 0
    %710 = vmatpush1.bf16.msra.mxu0 0
    %711 = vmatprep.subr.bf16.mxu0 0
    %712 = vmatpush1.bf16.msra.mxu0 0
    %713 = vmatprep.subr.bf16.mxu0 0
    %714 = vmatpush1.bf16.msra.mxu0 0
    %715 = vmatprep.subr.bf16.mxu0 0
    %716 = vmatpush1.bf16.msra.mxu0 0
    %717 = vmatprep.subr.bf16.mxu0 0
    %718 = vmatpush1.bf16.msra.mxu0 0
    %719 = vmatprep.mubr.bf16.mxu0 0
    %720 = vmatmul.mubr.bf16.gmra.mrb[0].mxu0 %v685
    %v721 = vpop.f32.mrb[0].mxu0
    %v722 = vadd.f32 %v671, %v721
    %v723 = vpop.f32.mrb[0].mxu0
    %v724 = vpop.f32.mrb[0].mxu0
    %v725 = vadd.f32 %v671, %v724
    %v726 = vpop.f32.mrb[0].mxu0
    %727 = vdwg.mxu0
    %v728 = vadd.f32 %v24, %v722
    %v729 = vadd.f32 %v25, %v725
    %v730 = vsel %vm68, %v728, 0.0
    %731 = vadd.xlane.f32.xlu0 %v730
    %v732 = vpop.xlane.xlu0 %731
    %v733 = vsel %vm68, %v729, 0.0
    %734 = vadd.xlane.f32.xlu0 %v733
    %v735 = vpop.xlane.xlu0 %734
    %v736 = vrcp.pop 32.0
    %v737 = vmul.f32 %v732, %v736
    %v738 = vmul.f32 %v735, %v736
    %v739 = vsub.f32 %v728, %v737
    %v740 = vsub.f32 %v729, %v738
    %v741 = vmul.f32 %v739, %v739
    %v742 = vmul.f32 %v740, %v740
    %v743 = vsel %vm68, %v741, 0.0
    %744 = vadd.xlane.f32.xlu0 %v743
    %v745 = vpop.xlane.xlu0 %744
    %v746 = vsel %vm68, %v742, 0.0
    %747 = vadd.xlane.f32.xlu0 %v746
    %v748 = vpop.xlane.xlu0 %747
    %v749 = vmul.f32 %v745, %v736
    %v750 = vmul.f32 %v748, %v736
    %v751 = vadd.f32 %v749, 1e-05
    %v752 = vadd.f32 %v750, 1e-05
    %v753 = vrsqrt.pop %v751
    %v754 = vrsqrt.pop %v752
    %v755 = vmul.f32 %v739, %v753
    %v756 = vmul.f32 %v740, %v754
    %758 = vrot.lane.b32.xlu0 %v671, 96
    %v759 = vpop.permute.xlu0 %758
    %v761 = vmul.f32 %v755, %v759
    %v762 = vmul.f32 %v756, %v759
    %763 = vrot.lane.b32.xlu0 %v671, 64
    %v764 = vpop.permute.xlu0 %763
    %v766 = vadd.f32 %v761, %v764
    %v767 = vadd.f32 %v762, %v764
    %v768 = vpack.c.bf16 %v767, %v766
    %v769 = vlaneseq
    %v770 = vshrl.u32 %v769, 7
    %v771 = vsub.s32 1, %v770
    %v772 = vrot.slane %v50, %v771
    %v773 = vunpack.c.l.b16 %v26
    %v774 = vunpack.c.l.b16 %v27
    %v775 = vunpack.c.l.b16 %v28
    %v776 = vunpack.c.l.b16 %v29
    %v777 = vpack.c.b16 %v774, %v773
    %v778 = vpack.c.b16 %v776, %v775
    %v782 = vsel %vm68, %v768, 0
    %784 = vmatprep.subr.bf16.mxu0 0
    %785 = vmatpush1.bf16.msra.mxu0 %v777
    %786 = vmatprep.subr.bf16.mxu0 0
    %787 = vmatpush1.bf16.msra.mxu0 %v778
    %788 = vmatprep.subr.bf16.mxu0 0
    %789 = vmatpush1.bf16.msra.mxu0 0
    %790 = vmatprep.subr.bf16.mxu0 0
    %791 = vmatpush1.bf16.msra.mxu0 0
    %792 = vmatprep.subr.bf16.mxu0 0
    %793 = vmatpush1.bf16.msra.mxu0 0
    %794 = vmatprep.subr.bf16.mxu0 0
    %795 = vmatpush1.bf16.msra.mxu0 0
    %796 = vmatprep.subr.bf16.mxu0 0
    %797 = vmatpush1.bf16.msra.mxu0 0
    %798 = vmatprep.subr.bf16.mxu0 0
    %799 = vmatpush1.bf16.msra.mxu0 0
    %800 = vmatprep.subr.bf16.mxu0 0
    %801 = vmatpush1.bf16.msra.mxu0 0
    %802 = vmatprep.subr.bf16.mxu0 0
    %803 = vmatpush1.bf16.msra.mxu0 0
    %804 = vmatprep.subr.bf16.mxu0 0
    %805 = vmatpush1.bf16.msra.mxu0 0
    %806 = vmatprep.subr.bf16.mxu0 0
    %807 = vmatpush1.bf16.msra.mxu0 0
    %808 = vmatprep.subr.bf16.mxu0 0
    %809 = vmatpush1.bf16.msra.mxu0 0
    %810 = vmatprep.subr.bf16.mxu0 0
    %811 = vmatpush1.bf16.msra.mxu0 0
    %812 = vmatprep.subr.bf16.mxu0 0
    %813 = vmatpush1.bf16.msra.mxu0 0
    %814 = vmatprep.subr.bf16.mxu0 0
    %815 = vmatpush1.bf16.msra.mxu0 0
    %816 = vmatprep.mubr.bf16.mxu0 0
    %817 = vmatmul.mubr.bf16.gmra.mrb[0].mxu0 %v782
    %v818 = vpop.f32.mrb[0].mxu0
    %v819 = vadd.f32 %v772, %v818
    %v820 = vpop.f32.mrb[0].mxu0
    %v821 = vpop.f32.mrb[0].mxu0
    %v822 = vadd.f32 %v772, %v821
    %v823 = vpop.f32.mrb[0].mxu0
    %824 = vdwg.mxu0
    %v825 = vmax.f32 %v819, 0.0
    %v826 = vmax.f32 %v822, 0.0
    %v827 = vpack.c.bf16 %v826, %v825
    %v844 = vunpack.c.l.b16 %v34
    %v845 = vunpack.c.l.b16 %v35
    %v846 = vunpack.c.l.b16 %v36
    %v847 = vunpack.c.l.b16 %v37
    %v848 = vunpack.c.l.b16 %v38
    %v849 = vunpack.c.l.b16 %v39
    %v850 = vunpack.c.l.b16 %v40
    %v851 = vunpack.c.l.b16 %v41
    %v852 = vunpack.c.l.b16 %v42
    %v853 = vunpack.c.l.b16 %v43
    %v854 = vunpack.c.l.b16 %v44
    %v855 = vunpack.c.l.b16 %v45
    %v856 = vunpack.c.l.b16 %v46
    %v857 = vunpack.c.l.b16 %v47
    %v858 = vunpack.c.l.b16 %v48
    %v859 = vunpack.c.l.b16 %v49
    %v860 = vpack.c.b16 %v845, %v844
    %v861 = vpack.c.b16 %v847, %v846
    %v862 = vpack.c.b16 %v849, %v848
    %v863 = vpack.c.b16 %v851, %v850
    %v864 = vpack.c.b16 %v853, %v852
    %v865 = vpack.c.b16 %v855, %v854
    %v866 = vpack.c.b16 %v857, %v856
    %v867 = vpack.c.b16 %v859, %v858
    %876 = vrot.lane.b32.xlu0 %v671, 32
    %v877 = vpop.permute.xlu0 %876
    %879 = vmatprep.subr.bf16.mxu0 0
    %880 = vmatpush1.bf16.msra.mxu0 %v860
    %881 = vmatprep.subr.bf16.mxu0 0
    %882 = vmatpush1.bf16.msra.mxu0 %v861
    %883 = vmatprep.subr.bf16.mxu0 0
    %884 = vmatpush1.bf16.msra.mxu0 %v862
    %885 = vmatprep.subr.bf16.mxu0 0
    %886 = vmatpush1.bf16.msra.mxu0 %v863
    %887 = vmatprep.subr.bf16.mxu0 0
    %888 = vmatpush1.bf16.msra.mxu0 %v864
    %889 = vmatprep.subr.bf16.mxu0 0
    %890 = vmatpush1.bf16.msra.mxu0 %v865
    %891 = vmatprep.subr.bf16.mxu0 0
    %892 = vmatpush1.bf16.msra.mxu0 %v866
    %893 = vmatprep.subr.bf16.mxu0 0
    %894 = vmatpush1.bf16.msra.mxu0 %v867
    %895 = vmatprep.subr.bf16.mxu0 0
    %896 = vmatpush1.bf16.msra.mxu0 0
    %897 = vmatprep.subr.bf16.mxu0 0
    %898 = vmatpush1.bf16.msra.mxu0 0
    %899 = vmatprep.subr.bf16.mxu0 0
    %900 = vmatpush1.bf16.msra.mxu0 0
    %901 = vmatprep.subr.bf16.mxu0 0
    %902 = vmatpush1.bf16.msra.mxu0 0
    %903 = vmatprep.subr.bf16.mxu0 0
    %904 = vmatpush1.bf16.msra.mxu0 0
    %905 = vmatprep.subr.bf16.mxu0 0
    %906 = vmatpush1.bf16.msra.mxu0 0
    %907 = vmatprep.subr.bf16.mxu0 0
    %908 = vmatpush1.bf16.msra.mxu0 0
    %909 = vmatprep.subr.bf16.mxu0 0
    %910 = vmatpush1.bf16.msra.mxu0 0
    %911 = vmatprep.mubr.bf16.mxu0 0
    %912 = vmatmul.mubr.bf16.gmra.mrb[0].mxu0 %v827
    %v913 = vpop.f32.mrb[0].mxu0
    %v914 = vadd.f32 %v877, %v913
    %v915 = vpop.f32.mrb[0].mxu0
    %v916 = vpop.f32.mrb[0].mxu0
    %v917 = vadd.f32 %v877, %v916
    %v918 = vpop.f32.mrb[0].mxu0
    %919 = vdwg.mxu0
    %v920 = vadd.f32 %v766, %v914
    %v921 = vadd.f32 %v767, %v917
    %v922 = vsel %vm68, %v920, 0.0
    %923 = vadd.xlane.f32.xlu0 %v922
    %v924 = vpop.xlane.xlu0 %923
    %v925 = vsel %vm68, %v921, 0.0
    %926 = vadd.xlane.f32.xlu0 %v925
    %v927 = vpop.xlane.xlu0 %926
    %v928 = vmul.f32 %v924, %v736
    %v929 = vmul.f32 %v927, %v736
    %v930 = vsub.f32 %v920, %v928
    %v931 = vsub.f32 %v921, %v929
    %v932 = vmul.f32 %v930, %v930
    %v933 = vmul.f32 %v931, %v931
    %v934 = vsel %vm68, %v932, 0.0
    %935 = vadd.xlane.f32.xlu0 %v934
    %v936 = vpop.xlane.xlu0 %935
    %v937 = vsel %vm68, %v933, 0.0
    %938 = vadd.xlane.f32.xlu0 %v937
    %v939 = vpop.xlane.xlu0 %938
    %v940 = vmul.f32 %v936, %v736
    %v941 = vmul.f32 %v939, %v736
    %v942 = vadd.f32 %v940, 1e-05
    %v943 = vadd.f32 %v941, 1e-05
    %v944 = vrsqrt.pop %v942
    %v945 = vrsqrt.pop %v943
    %v946 = vmul.f32 %v930, %v944
    %v947 = vmul.f32 %v931, %v945
    %v948 = vlaneseq
    %v949 = vshrl.u32 %v948, 7
    %v950 = vsub.s32 3, %v949
    %v951 = vrot.slane %v50, %v950
    %v952 = vmul.f32 %v946, %v951
    %v953 = vmul.f32 %v947, %v951
    %955 = vrot.lane.b32.xlu0 %v951, 96
    %v956 = vpop.permute.xlu0 %955
    %v958 = vadd.f32 %v952, %v956
    %v959 = vadd.f32 %v953, %v956
    %s960 = scalar_lea.vmem %s2, 32
    %v961 = vld [vmem:[%s960] sm:$0xff]
    %v962 = vld [vmem:[%s960 + $0x8] sm:$0xff]
    %v963 = vld [vmem:[%s960 + $0x10] sm:$0xff]
    %v964 = vld [vmem:[%s960 + $0x18] sm:$0xff]
    %s965 = scalar_lea.vmem %s3, 80
    %v966 = vld [vmem:[%s965] sm:$0xf]
    %v967 = vld [vmem:[%s965 + $0x4] sm:$0xf]
    %v968 = vld [vmem:[%s965 + $0x8] sm:$0xf]
    %v969 = vld [vmem:[%s965 + $0xc] sm:$0xf]
    %v970 = vld [vmem:[%s965 + $0x10] sm:$0xf]
    %v971 = vld [vmem:[%s965 + $0x14] sm:$0xf]
    %v972 = vld [vmem:[%s965 + $0x18] sm:$0xf]
    %v973 = vld [vmem:[%s965 + $0x1c] sm:$0xf]
    %v974 = vld [vmem:[%s965 + $0x20] sm:$0xf]
    %v975 = vld [vmem:[%s965 + $0x24] sm:$0xf]
    %v976 = vld [vmem:[%s965 + $0x28] sm:$0xf]
    %v977 = vld [vmem:[%s965 + $0x2c] sm:$0xf]
    %v978 = vld [vmem:[%s965 + $0x30] sm:$0xf]
    %v979 = vld [vmem:[%s965 + $0x34] sm:$0xf]
    %v980 = vld [vmem:[%s965 + $0x38] sm:$0xf]
    %v981 = vld [vmem:[%s965 + $0x3c] sm:$0xf]
    %v982 = vld [vmem:[%s965 + $0x40] sm:$0xf]
    %v983 = vld [vmem:[%s965 + $0x44] sm:$0xf]
    %v984 = vld [vmem:[%s965 + $0x48] sm:$0xf]
    %v985 = vld [vmem:[%s965 + $0x4c] sm:$0xf]
    %s986 = scalar_lea.vmem %s4, 4
    %v987 = vld [vmem:[%s986] sm:$0xf]
    %v988 = vpack.c.bf16 %v959, %v958
    %v989 = vlaneseq
    %v990 = vshrl.u32 %v989, 7
    %v991 = vsub.s32 0, %v990
    %v992 = vrot.slane %v987, %v991
    %v997 = vunpack.c.h.b16 %v961
    %v998 = vunpack.c.h.b16 %v962
    %v999 = vunpack.c.h.b16 %v963
    %v1000 = vunpack.c.h.b16 %v964
    %v1001 = vpack.c.b16 %v998, %v997
    %v1002 = vpack.c.b16 %v1000, %v999
    %v1006 = vsel %vm68, %v988, 0
    %1008 = vmatprep.subr.bf16.mxu0 0
    %1009 = vmatpush1.bf16.msra.mxu0 %v1001
    %1010 = vmatprep.subr.bf16.mxu0 0
    %1011 = vmatpush1.bf16.msra.mxu0 %v1002
    %1012 = vmatprep.subr.bf16.mxu0 0
    %1013 = vmatpush1.bf16.msra.mxu0 0
    %1014 = vmatprep.subr.bf16.mxu0 0
    %1015 = vmatpush1.bf16.msra.mxu0 0
    %1016 = vmatprep.subr.bf16.mxu0 0
    %1017 = vmatpush1.bf16.msra.mxu0 0
    %1018 = vmatprep.subr.bf16.mxu0 0
    %1019 = vmatpush1.bf16.msra.mxu0 0
    %1020 = vmatprep.subr.bf16.mxu0 0
    %1021 = vmatpush1.bf16.msra.mxu0 0
    %1022 = vmatprep.subr.bf16.mxu0 0
    %1023 = vmatpush1.bf16.msra.mxu0 0
    %1024 = vmatprep.subr.bf16.mxu0 0
    %1025 = vmatpush1.bf16.msra.mxu0 0
    %1026 = vmatprep.subr.bf16.mxu0 0
    %1027 = vmatpush1.bf16.msra.mxu0 0
    %1028 = vmatprep.subr.bf16.mxu0 0
    %1029 = vmatpush1.bf16.msra.mxu0 0
    %1030 = vmatprep.subr.bf16.mxu0 0
    %1031 = vmatpush1.bf16.msra.mxu0 0
    %1032 = vmatprep.subr.bf16.mxu0 0
    %1033 = vmatpush1.bf16.msra.mxu0 0
    %1034 = vmatprep.subr.bf16.mxu0 0
    %1035 = vmatpush1.bf16.msra.mxu0 0
    %1036 = vmatprep.subr.bf16.mxu0 0
    %1037 = vmatpush1.bf16.msra.mxu0 0
    %1038 = vmatprep.subr.bf16.mxu0 0
    %1039 = vmatpush1.bf16.msra.mxu0 0
    %1040 = vmatprep.mubr.bf16.mxu0 0
    %1041 = vmatmul.mubr.bf16.gmra.mrb[0].mxu0 %v1006
    %v1042 = vpop.f32.mrb[0].mxu0
    %v1043 = vadd.f32 %v992, %v1042
    %v1044 = vpop.f32.mrb[0].mxu0
    %v1045 = vpop.f32.mrb[0].mxu0
    %v1046 = vadd.f32 %v992, %v1045
    %v1047 = vpop.f32.mrb[0].mxu0
    %1048 = vdwg.mxu0
    %v1049 = vpack.c.bf16 %v1046, %v1043
    %1052 = vrot.lane.b32.xlu0 %v1043, 96
    %v1053 = vpop.permute.xlu0 %1052
    %1054 = vrot.lane.b32.xlu0 %v1046, 96
    %v1055 = vpop.permute.xlu0 %1054
    %1058 = vxpose.xlu0.b32.start [1/16] %v1053, 128
    %1059 = vxpose.xlu0.b32.cont [2/16] %v1055, 128
    %1060 = vxpose.xlu0.b32.cont [3/16] 0.0, 128
    %1061 = vxpose.xlu0.b32.cont [4/16] 0.0, 128
    %1062 = vxpose.xlu0.b32.cont [5/16] 0.0, 128
    %1063 = vxpose.xlu0.b32.cont [6/16] 0.0, 128
    %1064 = vxpose.xlu0.b32.cont [7/16] 0.0, 128
    %1065 = vxpose.xlu0.b32.cont [8/16] 0.0, 128
    %1066 = vxpose.xlu0.b32.cont [9/16] 0.0, 128
    %1067 = vxpose.xlu0.b32.cont [10/16] 0.0, 128
    %1068 = vxpose.xlu0.b32.cont [11/16] 0.0, 128
    %1069 = vxpose.xlu0.b32.cont [12/16] 0.0, 128
    %1070 = vxpose.xlu0.b32.cont [13/16] 0.0, 128
    %1071 = vxpose.xlu0.b32.cont [14/16] 0.0, 128
    %1072 = vxpose.xlu0.b32.cont [15/16] 0.0, 128
    %1073 = vxpose.xlu0.b32.end [16/16] 0.0, 128
    %v1074 = vpop.trf.xlu0
    %v1075 = vpop.trf.xlu0
    %v1076 = vpop.trf.xlu0
    %v1077 = vpop.trf.xlu0
    %v1078 = vpop.trf.xlu0
    %v1079 = vpop.trf.xlu0
    %v1080 = vpop.trf.xlu0
    %v1081 = vpop.trf.xlu0
    %v1082 = vpop.trf.xlu0
    %v1083 = vpop.trf.xlu0
    %v1084 = vpop.trf.xlu0
    %v1085 = vpop.trf.xlu0
    %v1086 = vpop.trf.xlu0
    %v1087 = vpop.trf.xlu0
    %v1088 = vpop.trf.xlu0
    %v1089 = vpop.trf.xlu0
    %v1090 = vpack.c.bf16 %v1074, %v1074
    %v1092 = vsel %vm155, %v1049, 0
    %v1095 = vsel %vm159, %v1090, 0
    %1097 = vmatprep.subr.bf16.mxu0 0
    %1098 = vmatpush1.bf16.msra.mxu0 %v1095
    %1099 = vmatprep.subr.bf16.mxu0 0
    %1100 = vmatpush1.bf16.msra.mxu0 0
    %1101 = vmatprep.subr.bf16.mxu0 0
    %1102 = vmatpush1.bf16.msra.mxu0 0
    %1103 = vmatprep.subr.bf16.mxu0 0
    %1104 = vmatpush1.bf16.msra.mxu0 0
    %1105 = vmatprep.subr.bf16.mxu0 0
    %1106 = vmatpush1.bf16.msra.mxu0 0
    %1107 = vmatprep.subr.bf16.mxu0 0
    %1108 = vmatpush1.bf16.msra.mxu0 0
    %1109 = vmatprep.subr.bf16.mxu0 0
    %1110 = vmatpush1.bf16.msra.mxu0 0
    %1111 = vmatprep.subr.bf16.mxu0 0
    %1112 = vmatpush1.bf16.msra.mxu0 0
    %1113 = vmatprep.subr.bf16.mxu0 0
    %1114 = vmatpush1.bf16.msra.mxu0 0
    %1115 = vmatprep.subr.bf16.mxu0 0
    %1116 = vmatpush1.bf16.msra.mxu0 0
    %1117 = vmatprep.subr.bf16.mxu0 0
    %1118 = vmatpush1.bf16.msra.mxu0 0
    %1119 = vmatprep.subr.bf16.mxu0 0
    %1120 = vmatpush1.bf16.msra.mxu0 0
    %1121 = vmatprep.subr.bf16.mxu0 0
    %1122 = vmatpush1.bf16.msra.mxu0 0
    %1123 = vmatprep.subr.bf16.mxu0 0
    %1124 = vmatpush1.bf16.msra.mxu0 0
    %1125 = vmatprep.subr.bf16.mxu0 0
    %1126 = vmatpush1.bf16.msra.mxu0 0
    %1127 = vmatprep.subr.bf16.mxu0 0
    %1128 = vmatpush1.bf16.msra.mxu0 0
    %1129 = vmatprep.mubr.bf16.mxu0 0
    %1130 = vmatmul.mubr.bf16.gmra.mrb[0].mxu0 %v1092
    %v1131 = vpop.f32.mrb[0].mxu0
    %v1132 = vadd.f32 %v22, %v1131
    %v1133 = vpop.f32.mrb[0].mxu0
    %v1134 = vpop.f32.mrb[0].mxu0
    %v1135 = vadd.f32 %v23, %v1134
    %v1136 = vpop.f32.mrb[0].mxu0
    %1137 = vdwg.mxu0
    %v1138 = vsel %vm204, %v1132, -inf
    %1139 = vmax.xlane.f32.xlu0 %v1138
    %v1140 = vpop.xlane.xlu0 %1139
    %v1141 = vsel %vm204, %v1135, -inf
    %1142 = vmax.xlane.f32.xlu0 %v1141
    %v1143 = vpop.xlane.xlu0 %1142
    %v1144 = vsub.f32 %v1132, %v1140
    %v1145 = vsub.f32 %v1135, %v1143
    %v1146 = vmul.f32 %v1144, 1.442695
    %v1147 = vpow.pop %v1146
    %v1148 = vmul.f32 %v1145, 1.442695
    %v1149 = vpow.pop %v1148
    %v1150 = vsel %vm204, %v1147, 0.0
    %1151 = vadd.xlane.f32.xlu0 %v1150
    %v1152 = vpop.xlane.xlu0 %1151
    %v1153 = vsel %vm204, %v1149, 0.0
    %1154 = vadd.xlane.f32.xlu0 %v1153
    %v1155 = vpop.xlane.xlu0 %1154
    %v1156 = vrcp.pop %v1152
    %v1157 = vrcp.pop %v1155
    %v1158 = vmul.f32 %v1147, %v1156
    %v1159 = vmul.f32 %v1149, %v1157
    %v1160 = vpack.c.bf16 %v1159, %v1158
    %1162 = vrot.lane.b32.xlu0 %v1049, 64
    %v1163 = vpop.permute.xlu0 %1162
    %v1166 = vsel %vm204, %v1160, 0
    %1168 = vmatprep.subr.bf16.mxu0 0
    %1169 = vmatpush1.bf16.msra.mxu0 %v1163
    %1170 = vmatprep.subr.bf16.mxu0 0
    %1171 = vmatpush1.bf16.msra.mxu0 0
    %1172 = vmatprep.subr.bf16.mxu0 0
    %1173 = vmatpush1.bf16.msra.mxu0 0
    %1174 = vmatprep.subr.bf16.mxu0 0
    %1175 = vmatpush1.bf16.msra.mxu0 0
    %1176 = vmatprep.subr.bf16.mxu0 0
    %1177 = vmatpush1.bf16.msra.mxu0 0
    %1178 = vmatprep.subr.bf16.mxu0 0
    %1179 = vmatpush1.bf16.msra.mxu0 0
    %1180 = vmatprep.subr.bf16.mxu0 0
    %1181 = vmatpush1.bf16.msra.mxu0 0
    %1182 = vmatprep.subr.bf16.mxu0 0
    %1183 = vmatpush1.bf16.msra.mxu0 0
    %1184 = vmatprep.subr.bf16.mxu0 0
    %1185 = vmatpush1.bf16.msra.mxu0 0
    %1186 = vmatprep.subr.bf16.mxu0 0
    %1187 = vmatpush1.bf16.msra.mxu0 0
    %1188 = vmatprep.subr.bf16.mxu0 0
    %1189 = vmatpush1.bf16.msra.mxu0 0
    %1190 = vmatprep.subr.bf16.mxu0 0
    %1191 = vmatpush1.bf16.msra.mxu0 0
    %1192 = vmatprep.subr.bf16.mxu0 0
    %1193 = vmatpush1.bf16.msra.mxu0 0
    %1194 = vmatprep.subr.bf16.mxu0 0
    %1195 = vmatpush1.bf16.msra.mxu0 0
    %1196 = vmatprep.subr.bf16.mxu0 0
    %1197 = vmatpush1.bf16.msra.mxu0 0
    %1198 = vmatprep.subr.bf16.mxu0 0
    %1199 = vmatpush1.bf16.msra.mxu0 0
    %1200 = vmatprep.mubr.bf16.mxu0 0
    %1201 = vmatmul.mubr.bf16.gmra.mrb[0].mxu0 %v1166
    %v1202 = vpop.f32.mrb[0].mxu0
    %v1203 = vadd.f32 0.0, %v1202
    %v1204 = vpop.f32.mrb[0].mxu0
    %v1205 = vpop.f32.mrb[0].mxu0
    %v1206 = vadd.f32 0.0, %v1205
    %v1207 = vpop.f32.mrb[0].mxu0
    %1208 = vdwg.mxu0
    %v1209 = vpack.c.bf16 %v1075, %v1075
    %1210 = vrot.lane.b32.xlu0 %v1049, 120
    %v1211 = vpop.permute.xlu0 %1210
    %v1213 = vsel %vm155, %v1211, 0
    %v1216 = vsel %vm159, %v1209, 0
    %1218 = vmatprep.subr.bf16.mxu0 0
    %1219 = vmatpush1.bf16.msra.mxu0 %v1216
    %1220 = vmatprep.subr.bf16.mxu0 0
    %1221 = vmatpush1.bf16.msra.mxu0 0
    %1222 = vmatprep.subr.bf16.mxu0 0
    %1223 = vmatpush1.bf16.msra.mxu0 0
    %1224 = vmatprep.subr.bf16.mxu0 0
    %1225 = vmatpush1.bf16.msra.mxu0 0
    %1226 = vmatprep.subr.bf16.mxu0 0
    %1227 = vmatpush1.bf16.msra.mxu0 0
    %1228 = vmatprep.subr.bf16.mxu0 0
    %1229 = vmatpush1.bf16.msra.mxu0 0
    %1230 = vmatprep.subr.bf16.mxu0 0
    %1231 = vmatpush1.bf16.msra.mxu0 0
    %1232 = vmatprep.subr.bf16.mxu0 0
    %1233 = vmatpush1.bf16.msra.mxu0 0
    %1234 = vmatprep.subr.bf16.mxu0 0
    %1235 = vmatpush1.bf16.msra.mxu0 0
    %1236 = vmatprep.subr.bf16.mxu0 0
    %1237 = vmatpush1.bf16.msra.mxu0 0
    %1238 = vmatprep.subr.bf16.mxu0 0
    %1239 = vmatpush1.bf16.msra.mxu0 0
    %1240 = vmatprep.subr.bf16.mxu0 0
    %1241 = vmatpush1.bf16.msra.mxu0 0
    %1242 = vmatprep.subr.bf16.mxu0 0
    %1243 = vmatpush1.bf16.msra.mxu0 0
    %1244 = vmatprep.subr.bf16.mxu0 0
    %1245 = vmatpush1.bf16.msra.mxu0 0
    %1246 = vmatprep.subr.bf16.mxu0 0
    %1247 = vmatpush1.bf16.msra.mxu0 0
    %1248 = vmatprep.subr.bf16.mxu0 0
    %1249 = vmatpush1.bf16.msra.mxu0 0
    %1250 = vmatprep.mubr.bf16.mxu0 0
    %1251 = vmatmul.mubr.bf16.gmra.mrb[0].mxu0 %v1213
    %v1252 = vpop.f32.mrb[0].mxu0
    %v1253 = vadd.f32 %v22, %v1252
    %v1254 = vpop.f32.mrb[0].mxu0
    %v1255 = vpop.f32.mrb[0].mxu0
    %v1256 = vadd.f32 %v23, %v1255
    %v1257 = vpop.f32.mrb[0].mxu0
    %1258 = vdwg.mxu0
    %v1259 = vsel %vm204, %v1253, -inf
    %1260 = vmax.xlane.f32.xlu0 %v1259
    %v1261 = vpop.xlane.xlu0 %1260
    %v1262 = vsel %vm204, %v1256, -inf
    %1263 = vmax.xlane.f32.xlu0 %v1262
    %v1264 = vpop.xlane.xlu0 %1263
    %v1265 = vsub.f32 %v1253, %v1261
    %v1266 = vsub.f32 %v1256, %v1264
    %v1267 = vmul.f32 %v1265, 1.442695
    %v1268 = vpow.pop %v1267
    %v1269 = vmul.f32 %v1266, 1.442695
    %v1270 = vpow.pop %v1269
    %v1271 = vsel %vm204, %v1268, 0.0
    %1272 = vadd.xlane.f32.xlu0 %v1271
    %v1273 = vpop.xlane.xlu0 %1272
    %v1274 = vsel %vm204, %v1270, 0.0
    %1275 = vadd.xlane.f32.xlu0 %v1274
    %v1276 = vpop.xlane.xlu0 %1275
    %v1277 = vrcp.pop %v1273
    %v1278 = vrcp.pop %v1276
    %v1279 = vmul.f32 %v1268, %v1277
    %v1280 = vmul.f32 %v1270, %v1278
    %v1281 = vpack.c.bf16 %v1280, %v1279
    %1282 = vrot.lane.b32.xlu0 %v1049, 56
    %v1283 = vpop.permute.xlu0 %1282
    %v1286 = vsel %vm204, %v1281, 0
    %1288 = vmatprep.subr.bf16.mxu0 0
    %1289 = vmatpush1.bf16.msra.mxu0 %v1283
    %1290 = vmatprep.subr.bf16.mxu0 0
    %1291 = vmatpush1.bf16.msra.mxu0 0
    %1292 = vmatprep.subr.bf16.mxu0 0
    %1293 = vmatpush1.bf16.msra.mxu0 0
    %1294 = vmatprep.subr.bf16.mxu0 0
    %1295 = vmatpush1.bf16.msra.mxu0 0
    %1296 = vmatprep.subr.bf16.mxu0 0
    %1297 = vmatpush1.bf16.msra.mxu0 0
    %1298 = vmatprep.subr.bf16.mxu0 0
    %1299 = vmatpush1.bf16.msra.mxu0 0
    %1300 = vmatprep.subr.bf16.mxu0 0
    %1301 = vmatpush1.bf16.msra.mxu0 0
    %1302 = vmatprep.subr.bf16.mxu0 0
    %1303 = vmatpush1.bf16.msra.mxu0 0
    %1304 = vmatprep.subr.bf16.mxu0 0
    %1305 = vmatpush1.bf16.msra.mxu0 0
    %1306 = vmatprep.subr.bf16.mxu0 0
    %1307 = vmatpush1.bf16.msra.mxu0 0
    %1308 = vmatprep.subr.bf16.mxu0 0
    %1309 = vmatpush1.bf16.msra.mxu0 0
    %1310 = vmatprep.subr.bf16.mxu0 0
    %1311 = vmatpush1.bf16.msra.mxu0 0
    %1312 = vmatprep.subr.bf16.mxu0 0
    %1313 = vmatpush1.bf16.msra.mxu0 0
    %1314 = vmatprep.subr.bf16.mxu0 0
    %1315 = vmatpush1.bf16.msra.mxu0 0
    %1316 = vmatprep.subr.bf16.mxu0 0
    %1317 = vmatpush1.bf16.msra.mxu0 0
    %1318 = vmatprep.subr.bf16.mxu0 0
    %1319 = vmatpush1.bf16.msra.mxu0 0
    %1320 = vmatprep.mubr.bf16.mxu0 0
    %1321 = vmatmul.mubr.bf16.gmra.mrb[0].mxu0 %v1286
    %v1322 = vpop.f32.mrb[0].mxu0
    %v1323 = vadd.f32 0.0, %v1322
    %v1324 = vpop.f32.mrb[0].mxu0
    %v1325 = vpop.f32.mrb[0].mxu0
    %v1326 = vadd.f32 0.0, %v1325
    %v1327 = vpop.f32.mrb[0].mxu0
    %1328 = vdwg.mxu0
    %v1329 = vpack.c.bf16 %v1076, %v1076
    %1330 = vrot.lane.b32.xlu0 %v1049, 112
    %v1331 = vpop.permute.xlu0 %1330
    %v1333 = vsel %vm155, %v1331, 0
    %v1336 = vsel %vm159, %v1329, 0
    %1338 = vmatprep.subr.bf16.mxu0 0
    %1339 = vmatpush1.bf16.msra.mxu0 %v1336
    %1340 = vmatprep.subr.bf16.mxu0 0
    %1341 = vmatpush1.bf16.msra.mxu0 0
    %1342 = vmatprep.subr.bf16.mxu0 0
    %1343 = vmatpush1.bf16.msra.mxu0 0
    %1344 = vmatprep.subr.bf16.mxu0 0
    %1345 = vmatpush1.bf16.msra.mxu0 0
    %1346 = vmatprep.subr.bf16.mxu0 0
    %1347 = vmatpush1.bf16.msra.mxu0 0
    %1348 = vmatprep.subr.bf16.mxu0 0
    %1349 = vmatpush1.bf16.msra.mxu0 0
    %1350 = vmatprep.subr.bf16.mxu0 0
    %1351 = vmatpush1.bf16.msra.mxu0 0
    %1352 = vmatprep.subr.bf16.mxu0 0
    %1353 = vmatpush1.bf16.msra.mxu0 0
    %1354 = vmatprep.subr.bf16.mxu0 0
    %1355 = vmatpush1.bf16.msra.mxu0 0
    %1356 = vmatprep.subr.bf16.mxu0 0
    %1357 = vmatpush1.bf16.msra.mxu0 0
    %1358 = vmatprep.subr.bf16.mxu0 0
    %1359 = vmatpush1.bf16.msra.mxu0 0
    %1360 = vmatprep.subr.bf16.mxu0 0
    %1361 = vmatpush1.bf16.msra.mxu0 0
    %1362 = vmatprep.subr.bf16.mxu0 0
    %1363 = vmatpush1.bf16.msra.mxu0 0
    %1364 = vmatprep.subr.bf16.mxu0 0
    %1365 = vmatpush1.bf16.msra.mxu0 0
    %1366 = vmatprep.subr.bf16.mxu0 0
    %1367 = vmatpush1.bf16.msra.mxu0 0
    %1368 = vmatprep.subr.bf16.mxu0 0
    %1369 = vmatpush1.bf16.msra.mxu0 0
    %1370 = vmatprep.mubr.bf16.mxu0 0
    %1371 = vmatmul.mubr.bf16.gmra.mrb[0].mxu0 %v1333
    %v1372 = vpop.f32.mrb[0].mxu0
    %v1373 = vadd.f32 %v22, %v1372
    %v1374 = vpop.f32.mrb[0].mxu0
    %v1375 = vpop.f32.mrb[0].mxu0
    %v1376 = vadd.f32 %v23, %v1375
    %v1377 = vpop.f32.mrb[0].mxu0
    %1378 = vdwg.mxu0
    %v1379 = vsel %vm204, %v1373, -inf
    %1380 = vmax.xlane.f32.xlu0 %v1379
    %v1381 = vpop.xlane.xlu0 %1380
    %v1382 = vsel %vm204, %v1376, -inf
    %1383 = vmax.xlane.f32.xlu0 %v1382
    %v1384 = vpop.xlane.xlu0 %1383
    %v1385 = vsub.f32 %v1373, %v1381
    %v1386 = vsub.f32 %v1376, %v1384
    %v1387 = vmul.f32 %v1385, 1.442695
    %v1388 = vpow.pop %v1387
    %v1389 = vmul.f32 %v1386, 1.442695
    %v1390 = vpow.pop %v1389
    %v1391 = vsel %vm204, %v1388, 0.0
    %1392 = vadd.xlane.f32.xlu0 %v1391
    %v1393 = vpop.xlane.xlu0 %1392
    %v1394 = vsel %vm204, %v1390, 0.0
    %1395 = vadd.xlane.f32.xlu0 %v1394
    %v1396 = vpop.xlane.xlu0 %1395
    %v1397 = vrcp.pop %v1393
    %v1398 = vrcp.pop %v1396
    %v1399 = vmul.f32 %v1388, %v1397
    %v1400 = vmul.f32 %v1390, %v1398
    %v1401 = vpack.c.bf16 %v1400, %v1399
    %1402 = vrot.lane.b32.xlu0 %v1049, 48
    %v1403 = vpop.permute.xlu0 %1402
    %v1406 = vsel %vm204, %v1401, 0
    %1408 = vmatprep.subr.bf16.mxu0 0
    %1409 = vmatpush1.bf16.msra.mxu0 %v1403
    %1410 = vmatprep.subr.bf16.mxu0 0
    %1411 = vmatpush1.bf16.msra.mxu0 0
    %1412 = vmatprep.subr.bf16.mxu0 0
    %1413 = vmatpush1.bf16.msra.mxu0 0
    %1414 = vmatprep.subr.bf16.mxu0 0
    %1415 = vmatpush1.bf16.msra.mxu0 0
    %1416 = vmatprep.subr.bf16.mxu0 0
    %1417 = vmatpush1.bf16.msra.mxu0 0
    %1418 = vmatprep.subr.bf16.mxu0 0
    %1419 = vmatpush1.bf16.msra.mxu0 0
    %1420 = vmatprep.subr.bf16.mxu0 0
    %1421 = vmatpush1.bf16.msra.mxu0 0
    %1422 = vmatprep.subr.bf16.mxu0 0
    %1423 = vmatpush1.bf16.msra.mxu0 0
    %1424 = vmatprep.subr.bf16.mxu0 0
    %1425 = vmatpush1.bf16.msra.mxu0 0
    %1426 = vmatprep.subr.bf16.mxu0 0
    %1427 = vmatpush1.bf16.msra.mxu0 0
    %1428 = vmatprep.subr.bf16.mxu0 0
    %1429 = vmatpush1.bf16.msra.mxu0 0
    %1430 = vmatprep.subr.bf16.mxu0 0
    %1431 = vmatpush1.bf16.msra.mxu0 0
    %1432 = vmatprep.subr.bf16.mxu0 0
    %1433 = vmatpush1.bf16.msra.mxu0 0
    %1434 = vmatprep.subr.bf16.mxu0 0
    %1435 = vmatpush1.bf16.msra.mxu0 0
    %1436 = vmatprep.subr.bf16.mxu0 0
    %1437 = vmatpush1.bf16.msra.mxu0 0
    %1438 = vmatprep.subr.bf16.mxu0 0
    %1439 = vmatpush1.bf16.msra.mxu0 0
    %1440 = vmatprep.mubr.bf16.mxu0 0
    %1441 = vmatmul.mubr.bf16.gmra.mrb[0].mxu0 %v1406
    %v1442 = vpop.f32.mrb[0].mxu0
    %v1443 = vadd.f32 0.0, %v1442
    %v1444 = vpop.f32.mrb[0].mxu0
    %v1445 = vpop.f32.mrb[0].mxu0
    %v1446 = vadd.f32 0.0, %v1445
    %v1447 = vpop.f32.mrb[0].mxu0
    %1448 = vdwg.mxu0
    %v1449 = vpack.c.bf16 %v1077, %v1077
    %1450 = vrot.lane.b32.xlu0 %v1049, 104
    %v1451 = vpop.permute.xlu0 %1450
    %v1453 = vsel %vm155, %v1451, 0
    %v1456 = vsel %vm159, %v1449, 0
    %1458 = vmatprep.subr.bf16.mxu0 0
    %1459 = vmatpush1.bf16.msra.mxu0 %v1456
    %1460 = vmatprep.subr.bf16.mxu0 0
    %1461 = vmatpush1.bf16.msra.mxu0 0
    %1462 = vmatprep.subr.bf16.mxu0 0
    %1463 = vmatpush1.bf16.msra.mxu0 0
    %1464 = vmatprep.subr.bf16.mxu0 0
    %1465 = vmatpush1.bf16.msra.mxu0 0
    %1466 = vmatprep.subr.bf16.mxu0 0
    %1467 = vmatpush1.bf16.msra.mxu0 0
    %1468 = vmatprep.subr.bf16.mxu0 0
    %1469 = vmatpush1.bf16.msra.mxu0 0
    %1470 = vmatprep.subr.bf16.mxu0 0
    %1471 = vmatpush1.bf16.msra.mxu0 0
    %1472 = vmatprep.subr.bf16.mxu0 0
    %1473 = vmatpush1.bf16.msra.mxu0 0
    %1474 = vmatprep.subr.bf16.mxu0 0
    %1475 = vmatpush1.bf16.msra.mxu0 0
    %1476 = vmatprep.subr.bf16.mxu0 0
    %1477 = vmatpush1.bf16.msra.mxu0 0
    %1478 = vmatprep.subr.bf16.mxu0 0
    %1479 = vmatpush1.bf16.msra.mxu0 0
    %1480 = vmatprep.subr.bf16.mxu0 0
    %1481 = vmatpush1.bf16.msra.mxu0 0
    %1482 = vmatprep.subr.bf16.mxu0 0
    %1483 = vmatpush1.bf16.msra.mxu0 0
    %1484 = vmatprep.subr.bf16.mxu0 0
    %1485 = vmatpush1.bf16.msra.mxu0 0
    %1486 = vmatprep.subr.bf16.mxu0 0
    %1487 = vmatpush1.bf16.msra.mxu0 0
    %1488 = vmatprep.subr.bf16.mxu0 0
    %1489 = vmatpush1.bf16.msra.mxu0 0
    %1490 = vmatprep.mubr.bf16.mxu0 0
    %1491 = vmatmul.mubr.bf16.gmra.mrb[0].mxu0 %v1453
    %v1492 = vpop.f32.mrb[0].mxu0
    %v1493 = vadd.f32 %v22, %v1492
    %v1494 = vpop.f32.mrb[0].mxu0
    %v1495 = vpop.f32.mrb[0].mxu0
    %v1496 = vadd.f32 %v23, %v1495
    %v1497 = vpop.f32.mrb[0].mxu0
    %1498 = vdwg.mxu0
    %v1499 = vsel %vm204, %v1493, -inf
    %1500 = vmax.xlane.f32.xlu0 %v1499
    %v1501 = vpop.xlane.xlu0 %1500
    %v1502 = vsel %vm204, %v1496, -inf
    %1503 = vmax.xlane.f32.xlu0 %v1502
    %v1504 = vpop.xlane.xlu0 %1503
    %v1505 = vsub.f32 %v1493, %v1501
    %v1506 = vsub.f32 %v1496, %v1504
    %v1507 = vmul.f32 %v1505, 1.442695
    %v1508 = vpow.pop %v1507
    %v1509 = vmul.f32 %v1506, 1.442695
    %v1510 = vpow.pop %v1509
    %v1511 = vsel %vm204, %v1508, 0.0
    %1512 = vadd.xlane.f32.xlu0 %v1511
    %v1513 = vpop.xlane.xlu0 %1512
    %v1514 = vsel %vm204, %v1510, 0.0
    %1515 = vadd.xlane.f32.xlu0 %v1514
    %v1516 = vpop.xlane.xlu0 %1515
    %v1517 = vrcp.pop %v1513
    %v1518 = vrcp.pop %v1516
    %v1519 = vmul.f32 %v1508, %v1517
    %v1520 = vmul.f32 %v1510, %v1518
    %v1521 = vpack.c.bf16 %v1520, %v1519
    %1522 = vrot.lane.b32.xlu0 %v1049, 40
    %v1523 = vpop.permute.xlu0 %1522
    %v1526 = vsel %vm204, %v1521, 0
    %1528 = vmatprep.subr.bf16.mxu0 0
    %1529 = vmatpush1.bf16.msra.mxu0 %v1523
    %1530 = vmatprep.subr.bf16.mxu0 0
    %1531 = vmatpush1.bf16.msra.mxu0 0
    %1532 = vmatprep.subr.bf16.mxu0 0
    %1533 = vmatpush1.bf16.msra.mxu0 0
    %1534 = vmatprep.subr.bf16.mxu0 0
    %1535 = vmatpush1.bf16.msra.mxu0 0
    %1536 = vmatprep.subr.bf16.mxu0 0
    %1537 = vmatpush1.bf16.msra.mxu0 0
    %1538 = vmatprep.subr.bf16.mxu0 0
    %1539 = vmatpush1.bf16.msra.mxu0 0
    %1540 = vmatprep.subr.bf16.mxu0 0
    %1541 = vmatpush1.bf16.msra.mxu0 0
    %1542 = vmatprep.subr.bf16.mxu0 0
    %1543 = vmatpush1.bf16.msra.mxu0 0
    %1544 = vmatprep.subr.bf16.mxu0 0
    %1545 = vmatpush1.bf16.msra.mxu0 0
    %1546 = vmatprep.subr.bf16.mxu0 0
    %1547 = vmatpush1.bf16.msra.mxu0 0
    %1548 = vmatprep.subr.bf16.mxu0 0
    %1549 = vmatpush1.bf16.msra.mxu0 0
    %1550 = vmatprep.subr.bf16.mxu0 0
    %1551 = vmatpush1.bf16.msra.mxu0 0
    %1552 = vmatprep.subr.bf16.mxu0 0
    %1553 = vmatpush1.bf16.msra.mxu0 0
    %1554 = vmatprep.subr.bf16.mxu0 0
    %1555 = vmatpush1.bf16.msra.mxu0 0
    %1556 = vmatprep.subr.bf16.mxu0 0
    %1557 = vmatpush1.bf16.msra.mxu0 0
    %1558 = vmatprep.subr.bf16.mxu0 0
    %1559 = vmatpush1.bf16.msra.mxu0 0
    %1560 = vmatprep.mubr.bf16.mxu0 0
    %1561 = vmatmul.mubr.bf16.gmra.mrb[0].mxu0 %v1526
    %v1562 = vpop.f32.mrb[0].mxu0
    %v1563 = vadd.f32 0.0, %v1562
    %v1564 = vpop.f32.mrb[0].mxu0
    %v1565 = vpop.f32.mrb[0].mxu0
    %v1566 = vadd.f32 0.0, %v1565
    %v1567 = vpop.f32.mrb[0].mxu0
    %1568 = vdwg.mxu0
    %1571 = vrot.lane.b32.xlu0 %v1323, 8
    %v1572 = vpop.permute.xlu0 %1571
    %1573 = vrot.lane.b32.xlu0 %v1326, 8
    %v1574 = vpop.permute.xlu0 %1573
    %1579 = vrot.lane.b32.xlu0 %v1443, 16
    %v1580 = vpop.permute.xlu0 %1579
    %1581 = vrot.lane.b32.xlu0 %v1446, 16
    %v1582 = vpop.permute.xlu0 %1581
    %1587 = vrot.lane.b32.xlu0 %v1563, 24
    %v1588 = vpop.permute.xlu0 %1587
    %1589 = vrot.lane.b32.xlu0 %v1566, 24
    %v1590 = vpop.permute.xlu0 %1589
    %v1593 = vsel %vm155, %v1203, %v1572
    %v1594 = vsel %vm155, %v1206, %v1574
    %v1595 = vsel %vm204, %v1593, %v1580
    %v1596 = vsel %vm204, %v1594, %v1582
    %v1597 = vsel %vm664, %v1595, %v1588
    %v1598 = vsel %vm664, %v1596, %v1590
    %v1599 = vpack.c.bf16 %v1598, %v1597
    %v1600 = vlaneseq
    %v1601 = vshrl.u32 %v1600, 7
    %v1602 = vsub.s32 2, %v1601
    %v1603 = vrot.slane %v987, %v1602
    %v1608 = vunpack.c.l.b16 %v966
    %v1609 = vunpack.c.l.b16 %v967
    %v1610 = vunpack.c.l.b16 %v968
    %v1611 = vunpack.c.l.b16 %v969
    %v1612 = vpack.c.b16 %v1609, %v1608
    %v1613 = vpack.c.b16 %v1611, %v1610
    %v1617 = vsel %vm68, %v1599, 0
    %1619 = vmatprep.subr.bf16.mxu0 0
    %1620 = vmatpush1.bf16.msra.mxu0 %v1612
    %1621 = vmatprep.subr.bf16.mxu0 0
    %1622 = vmatpush1.bf16.msra.mxu0 %v1613
    %1623 = vmatprep.subr.bf16.mxu0 0
    %1624 = vmatpush1.bf16.msra.mxu0 0
    %1625 = vmatprep.subr.bf16.mxu0 0
    %1626 = vmatpush1.bf16.msra.mxu0 0
    %1627 = vmatprep.subr.bf16.mxu0 0
    %1628 = vmatpush1.bf16.msra.mxu0 0
    %1629 = vmatprep.subr.bf16.mxu0 0
    %1630 = vmatpush1.bf16.msra.mxu0 0
    %1631 = vmatprep.subr.bf16.mxu0 0
    %1632 = vmatpush1.bf16.msra.mxu0 0
    %1633 = vmatprep.subr.bf16.mxu0 0
    %1634 = vmatpush1.bf16.msra.mxu0 0
    %1635 = vmatprep.subr.bf16.mxu0 0
    %1636 = vmatpush1.bf16.msra.mxu0 0
    %1637 = vmatprep.subr.bf16.mxu0 0
    %1638 = vmatpush1.bf16.msra.mxu0 0
    %1639 = vmatprep.subr.bf16.mxu0 0
    %1640 = vmatpush1.bf16.msra.mxu0 0
    %1641 = vmatprep.subr.bf16.mxu0 0
    %1642 = vmatpush1.bf16.msra.mxu0 0
    %1643 = vmatprep.subr.bf16.mxu0 0
    %1644 = vmatpush1.bf16.msra.mxu0 0
    %1645 = vmatprep.subr.bf16.mxu0 0
    %1646 = vmatpush1.bf16.msra.mxu0 0
    %1647 = vmatprep.subr.bf16.mxu0 0
    %1648 = vmatpush1.bf16.msra.mxu0 0
    %1649 = vmatprep.subr.bf16.mxu0 0
    %1650 = vmatpush1.bf16.msra.mxu0 0
    %1651 = vmatprep.mubr.bf16.mxu0 0
    %1652 = vmatmul.mubr.bf16.gmra.mrb[0].mxu0 %v1617
    %v1653 = vpop.f32.mrb[0].mxu0
    %v1654 = vadd.f32 %v1603, %v1653
    %v1655 = vpop.f32.mrb[0].mxu0
    %v1656 = vpop.f32.mrb[0].mxu0
    %v1657 = vadd.f32 %v1603, %v1656
    %v1658 = vpop.f32.mrb[0].mxu0
    %1659 = vdwg.mxu0
    %v1660 = vadd.f32 %v958, %v1654
    %v1661 = vadd.f32 %v959, %v1657
    %v1662 = vsel %vm68, %v1660, 0.0
    %1663 = vadd.xlane.f32.xlu0 %v1662
    %v1664 = vpop.xlane.xlu0 %1663
    %v1665 = vsel %vm68, %v1661, 0.0
    %1666 = vadd.xlane.f32.xlu0 %v1665
    %v1667 = vpop.xlane.xlu0 %1666
    %v1668 = vmul.f32 %v1664, %v736
    %v1669 = vmul.f32 %v1667, %v736
    %v1670 = vsub.f32 %v1660, %v1668
    %v1671 = vsub.f32 %v1661, %v1669
    %v1672 = vmul.f32 %v1670, %v1670
    %v1673 = vmul.f32 %v1671, %v1671
    %v1674 = vsel %vm68, %v1672, 0.0
    %1675 = vadd.xlane.f32.xlu0 %v1674
    %v1676 = vpop.xlane.xlu0 %1675
    %v1677 = vsel %vm68, %v1673, 0.0
    %1678 = vadd.xlane.f32.xlu0 %v1677
    %v1679 = vpop.xlane.xlu0 %1678
    %v1680 = vmul.f32 %v1676, %v736
    %v1681 = vmul.f32 %v1679, %v736
    %v1682 = vadd.f32 %v1680, 1e-05
    %v1683 = vadd.f32 %v1681, 1e-05
    %v1684 = vrsqrt.pop %v1682
    %v1685 = vrsqrt.pop %v1683
    %v1686 = vmul.f32 %v1670, %v1684
    %v1687 = vmul.f32 %v1671, %v1685
    %1689 = vrot.lane.b32.xlu0 %v1603, 96
    %v1690 = vpop.permute.xlu0 %1689
    %v1692 = vmul.f32 %v1686, %v1690
    %v1693 = vmul.f32 %v1687, %v1690
    %1694 = vrot.lane.b32.xlu0 %v1603, 64
    %v1695 = vpop.permute.xlu0 %1694
    %v1697 = vadd.f32 %v1692, %v1695
    %v1698 = vadd.f32 %v1693, %v1695
    %v1699 = vpack.c.bf16 %v1698, %v1697
    %v1700 = vlaneseq
    %v1701 = vshrl.u32 %v1700, 7
    %v1702 = vsub.s32 1, %v1701
    %v1703 = vrot.slane %v987, %v1702
    %v1704 = vunpack.c.l.b16 %v961
    %v1705 = vunpack.c.l.b16 %v962
    %v1706 = vunpack.c.l.b16 %v963
    %v1707 = vunpack.c.l.b16 %v964
    %v1708 = vpack.c.b16 %v1705, %v1704
    %v1709 = vpack.c.b16 %v1707, %v1706
    %v1713 = vsel %vm68, %v1699, 0
    %1715 = vmatprep.subr.bf16.mxu0 0
    %1716 = vmatpush1.bf16.msra.mxu0 %v1708
    %1717 = vmatprep.subr.bf16.mxu0 0
    %1718 = vmatpush1.bf16.msra.mxu0 %v1709
    %1719 = vmatprep.subr.bf16.mxu0 0
    %1720 = vmatpush1.bf16.msra.mxu0 0
    %1721 = vmatprep.subr.bf16.mxu0 0
    %1722 = vmatpush1.bf16.msra.mxu0 0
    %1723 = vmatprep.subr.bf16.mxu0 0
    %1724 = vmatpush1.bf16.msra.mxu0 0
    %1725 = vmatprep.subr.bf16.mxu0 0
    %1726 = vmatpush1.bf16.msra.mxu0 0
    %1727 = vmatprep.subr.bf16.mxu0 0
    %1728 = vmatpush1.bf16.msra.mxu0 0
    %1729 = vmatprep.subr.bf16.mxu0 0
    %1730 = vmatpush1.bf16.msra.mxu0 0
    %1731 = vmatprep.subr.bf16.mxu0 0
    %1732 = vmatpush1.bf16.msra.mxu0 0
    %1733 = vmatprep.subr.bf16.mxu0 0
    %1734 = vmatpush1.bf16.msra.mxu0 0
    %1735 = vmatprep.subr.bf16.mxu0 0
    %1736 = vmatpush1.bf16.msra.mxu0 0
    %1737 = vmatprep.subr.bf16.mxu0 0
    %1738 = vmatpush1.bf16.msra.mxu0 0
    %1739 = vmatprep.subr.bf16.mxu0 0
    %1740 = vmatpush1.bf16.msra.mxu0 0
    %1741 = vmatprep.subr.bf16.mxu0 0
    %1742 = vmatpush1.bf16.msra.mxu0 0
    %1743 = vmatprep.subr.bf16.mxu0 0
    %1744 = vmatpush1.bf16.msra.mxu0 0
    %1745 = vmatprep.subr.bf16.mxu0 0
    %1746 = vmatpush1.bf16.msra.mxu0 0
    %1747 = vmatprep.mubr.bf16.mxu0 0
    %1748 = vmatmul.mubr.bf16.gmra.mrb[0].mxu0 %v1713
    %v1749 = vpop.f32.mrb[0].mxu0
    %v1750 = vadd.f32 %v1703, %v1749
    %v1751 = vpop.f32.mrb[0].mxu0
    %v1752 = vpop.f32.mrb[0].mxu0
    %v1753 = vadd.f32 %v1703, %v1752
    %v1754 = vpop.f32.mrb[0].mxu0
    %1755 = vdwg.mxu0
    %v1756 = vmax.f32 %v1750, 0.0
    %v1757 = vmax.f32 %v1753, 0.0
    %v1758 = vpack.c.bf16 %v1757, %v1756
    %v1775 = vunpack.c.l.b16 %v970
    %v1776 = vunpack.c.l.b16 %v971
    %v1777 = vunpack.c.l.b16 %v972
    %v1778 = vunpack.c.l.b16 %v973
    %v1779 = vunpack.c.l.b16 %v974
    %v1780 = vunpack.c.l.b16 %v975
    %v1781 = vunpack.c.l.b16 %v976
    %v1782 = vunpack.c.l.b16 %v977
    %v1783 = vunpack.c.l.b16 %v978
    %v1784 = vunpack.c.l.b16 %v979
    %v1785 = vunpack.c.l.b16 %v980
    %v1786 = vunpack.c.l.b16 %v981
    %v1787 = vunpack.c.l.b16 %v982
    %v1788 = vunpack.c.l.b16 %v983
    %v1789 = vunpack.c.l.b16 %v984
    %v1790 = vunpack.c.l.b16 %v985
    %v1791 = vpack.c.b16 %v1776, %v1775
    %v1792 = vpack.c.b16 %v1778, %v1777
    %v1793 = vpack.c.b16 %v1780, %v1779
    %v1794 = vpack.c.b16 %v1782, %v1781
    %v1795 = vpack.c.b16 %v1784, %v1783
    %v1796 = vpack.c.b16 %v1786, %v1785
    %v1797 = vpack.c.b16 %v1788, %v1787
    %v1798 = vpack.c.b16 %v1790, %v1789
    %1807 = vrot.lane.b32.xlu0 %v1603, 32
    %v1808 = vpop.permute.xlu0 %1807
    %1810 = vmatprep.subr.bf16.mxu0 0
    %1811 = vmatpush1.bf16.msra.mxu0 %v1791
    %1812 = vmatprep.subr.bf16.mxu0 0
    %1813 = vmatpush1.bf16.msra.mxu0 %v1792
    %1814 = vmatprep.subr.bf16.mxu0 0
    %1815 = vmatpush1.bf16.msra.mxu0 %v1793
    %1816 = vmatprep.subr.bf16.mxu0 0
    %1817 = vmatpush1.bf16.msra.mxu0 %v1794
    %1818 = vmatprep.subr.bf16.mxu0 0
    %1819 = vmatpush1.bf16.msra.mxu0 %v1795
    %1820 = vmatprep.subr.bf16.mxu0 0
    %1821 = vmatpush1.bf16.msra.mxu0 %v1796
    %1822 = vmatprep.subr.bf16.mxu0 0
    %1823 = vmatpush1.bf16.msra.mxu0 %v1797
    %1824 = vmatprep.subr.bf16.mxu0 0
    %1825 = vmatpush1.bf16.msra.mxu0 %v1798
    %1826 = vmatprep.subr.bf16.mxu0 0
    %1827 = vmatpush1.bf16.msra.mxu0 0
    %1828 = vmatprep.subr.bf16.mxu0 0
    %1829 = vmatpush1.bf16.msra.mxu0 0
    %1830 = vmatprep.subr.bf16.mxu0 0
    %1831 = vmatpush1.bf16.msra.mxu0 0
    %1832 = vmatprep.subr.bf16.mxu0 0
    %1833 = vmatpush1.bf16.msra.mxu0 0
    %1834 = vmatprep.subr.bf16.mxu0 0
    %1835 = vmatpush1.bf16.msra.mxu0 0
    %1836 = vmatprep.subr.bf16.mxu0 0
    %1837 = vmatpush1.bf16.msra.mxu0 0
    %1838 = vmatprep.subr.bf16.mxu0 0
    %1839 = vmatpush1.bf16.msra.mxu0 0
    %1840 = vmatprep.subr.bf16.mxu0 0
    %1841 = vmatpush1.bf16.msra.mxu0 0
    %1842 = vmatprep.mubr.bf16.mxu0 0
    %1843 = vmatmul.mubr.bf16.gmra.mrb[0].mxu0 %v1758
    %v1844 = vpop.f32.mrb[0].mxu0
    %v1845 = vadd.f32 %v1808, %v1844
    %v1846 = vpop.f32.mrb[0].mxu0
    %v1847 = vpop.f32.mrb[0].mxu0
    %v1848 = vadd.f32 %v1808, %v1847
    %v1849 = vpop.f32.mrb[0].mxu0
    %1850 = vdwg.mxu0
    %v1851 = vadd.f32 %v1697, %v1845
    %v1852 = vadd.f32 %v1698, %v1848
    %v1853 = vsel %vm68, %v1851, 0.0
    %1854 = vadd.xlane.f32.xlu0 %v1853
    %v1855 = vpop.xlane.xlu0 %1854
    %v1856 = vsel %vm68, %v1852, 0.0
    %1857 = vadd.xlane.f32.xlu0 %v1856
    %v1858 = vpop.xlane.xlu0 %1857
    %v1859 = vmul.f32 %v1855, %v736
    %v1860 = vmul.f32 %v1858, %v736
    %v1861 = vsub.f32 %v1851, %v1859
    %v1862 = vsub.f32 %v1852, %v1860
    %v1863 = vmul.f32 %v1861, %v1861
    %v1864 = vmul.f32 %v1862, %v1862
    %v1865 = vsel %vm68, %v1863, 0.0
    %1866 = vadd.xlane.f32.xlu0 %v1865
    %v1867 = vpop.xlane.xlu0 %1866
    %v1868 = vsel %vm68, %v1864, 0.0
    %1869 = vadd.xlane.f32.xlu0 %v1868
    %v1870 = vpop.xlane.xlu0 %1869
    %v1871 = vmul.f32 %v1867, %v736
    %v1872 = vmul.f32 %v1870, %v736
    %v1873 = vadd.f32 %v1871, 1e-05
    %v1874 = vadd.f32 %v1872, 1e-05
    %v1875 = vrsqrt.pop %v1873
    %v1876 = vrsqrt.pop %v1874
    %v1877 = vmul.f32 %v1861, %v1875
    %v1878 = vmul.f32 %v1862, %v1876
    %v1879 = vlaneseq
    %v1880 = vshrl.u32 %v1879, 7
    %v1881 = vsub.s32 3, %v1880
    %v1882 = vrot.slane %v987, %v1881
    %v1883 = vmul.f32 %v1877, %v1882
    %v1884 = vmul.f32 %v1878, %v1882
    %1886 = vrot.lane.b32.xlu0 %v1882, 96
    %v1887 = vpop.permute.xlu0 %1886
    %v1889 = vadd.f32 %v1883, %v1887
    %v1890 = vadd.f32 %v1884, %v1887
    %1891 = vst.msk [vmem:[#allocation2] sm:$0xff] %vm68, %v1889
    %1892 = vst.msk [vmem:[#allocation2 + $0x8] sm:$0xff] %vm68, %v1890
    // Predicated region
    $region22: #{tpu_custom_call.1} parent=1 // pred_check
      _
    $region23: #{tpu_custom_call.1} parent=1 // pred_check_branch
      %1894 = sbr.rel (0) target = $region25
    $region24: #{tpu_custom_call.1} parent=1 // pred_region
      %s1896 = ssub.s32 256, 256
      %1897 = vsyncadd [#allocation3], %s1896
      %s1898 = sshll.u32 [#allocation2], 4
      %s1899 = int_to_ptr.vmem [resolvable:$true] %s1898
      %1904 = dma.vmem_to_hbm [thread:$0]  %s1899, 256, %s5, [#allocation3], 128, 128, 8
    $region25: #{tpu_custom_call.1} parent=1 // pred_fallthru
      _
    // Predicated region
    $region26: #{tpu_custom_call.1} parent=1 // pred_check
      _
    $region27: #{tpu_custom_call.1} parent=1 // pred_check_branch
      %1906 = sbr.rel (0) target = $region29
    $region28: #{tpu_custom_call.1} parent=1 // pred_region
      %1907 = dma.done [#allocation3], 256
    $region29: #{tpu_custom_call.1} parent=1 // pred_fallthru
      _
    %1908 = vsyncpa [#allocation3], 1

</llo_original>
